<compile_context>
chip_gen: v7x
topology: tpu7x:2x2x1
jax: 0.10.0
libtpu: 0.0.40
codegen_flags: <defaults>
</compile_context>

<pallas_src>
import jax
import jax.numpy as jnp
import numpy as np
from jax import lax
from jax.experimental import pallas as pl
from jax.experimental.pallas import tpu as pltpu


def _round_up(x, m):
    return ((x + m - 1) // m) * m


def _make_convkb_kernel(out_channels, compute_dtype):
    cdt = compute_dtype

    def kernel(cw_ref, cb_ref, fcb_ref,        # SMEM: (C,3), (C,), (1,)
               idx_ref, h_ref, t_ref,          # VMEM streams: (TB,1) i32, (TB,D), (TB,D)
               rel_tbl_ref, fw_ref,            # VMEM resident: (R,D), (C,D)
               o_ref):                         # VMEM out: (TB,1) f32
        TB, D = h_ref.shape
        R = rel_tbl_ref.shape[0]

        # Relation gather as a one-hot matmul on the (otherwise idle) MXU.
        tbl = rel_tbl_ref[...]
        onehot = (idx_ref[...] ==
                  lax.broadcasted_iota(jnp.int32, (TB, R), 1)).astype(tbl.dtype)
        # NOTE: with an f32 table the MXU may round operands to bf16 at default
        # precision; the error affects only the relation tap (~1e-3 relative).
        r = jnp.dot(onehot, tbl, preferred_element_type=jnp.float32).astype(cdt)

        h = h_ref[...].astype(cdt)
        t = t_ref[...].astype(cdt)

        def body(c, acc):
            w0 = cw_ref[c, 0].astype(cdt)
            w1 = cw_ref[c, 1].astype(cdt)
            w2 = cw_ref[c, 2].astype(cdt)
            b = cb_ref[c].astype(cdt)
            # 1x3 conv tap + ReLU on the VPU.
            act = jnp.maximum(h * w0 + r * w1 + t * w2 + b, 0.0)
            # TODO(synk): dropout skipped (inference identity); training mode
            # would need pltpu.prng_seed / pltpu.prng_random_bits masking here.
            fw_row = fw_ref[pl.ds(c, 1), :].astype(cdt)     # (1, D) lane-dense row
            return acc + act * fw_row                       # promotes into f32 acc

        acc = lax.fori_loop(0, out_channels, body,
                            jnp.zeros((TB, D), jnp.float32), unroll=True)
        # Single cross-lane reduction (XLU) + fc bias.
        o_ref[...] = jnp.sum(acc, axis=-1, keepdims=True) + fcb_ref[0]

    return kernel


def convkb_bert_forward(head, tail, relation_embeddings, w_relation,
                        batch_inputs, conv_w, conv_b, fc_w, fc_b, *,
                        stream_dtype=jnp.float32,
                        compute_dtype=jnp.float32,
                        batch_tile=256,
                        vmem_limit_bytes=40 * 1024 * 1024):
    """head/tail: (B, D); relation_embeddings: (R, D1); w_relation: (R, D2);
    batch_inputs: (B, 3) int with column 1 = relation index."""
    B, D = head.shape
    C = conv_w.shape[0]
    R, D1 = relation_embeddings.shape
    D2 = w_relation.shape[1]
    assert D1 + D2 == D, "head/tail dim must equal rel_emb_dim + bert_dim"
    # Lane-alignment guard: misaligned feature dims would force hidden VMEM copies.
    assert D % 128 == 0 and D1 % 128 == 0 and D2 % 128 == 0, \
        "feature dims must be multiples of 128 lanes"

    # Relation table kept resident in VMEM; the gather happens inside the kernel.
    rel_table = jnp.concatenate(
        [relation_embeddings, w_relation], axis=1).astype(stream_dtype)   # (R, D)
    tbl_bytes = R * D * jnp.dtype(stream_dtype).itemsize
    assert tbl_bytes <= 16 * 1024 * 1024, \
        "relation table too large for VMEM residency"
    # TODO(synk): for very large R, fall back to an XLA-side gather with streamed
    # relation halves instead of VMEM residency.

    cw = conv_w.reshape(C, 3).astype(jnp.float32)      # (C, 3) taps [H, R, T] (SMEM)
    cb = conv_b.astype(jnp.float32)                    # (C,)
    fcb = fc_b.reshape(1).astype(jnp.float32)          # (1,)
    # PyTorch flatten is channel-major (index c*D + d) -> lane-dense (C, D) rows.
    fcw = fc_w.reshape(C, D).astype(compute_dtype)     # (C, D), VMEM resident

    # Batch tiling: multiple of 8 sublanes; keep >= 2 grid steps when possible so
    # the "parallel" axis can be sharded across both v7x TensorCores.
    tb_cap = _round_up(B, 8)
    TB = _round_up(min(batch_tile, tb_cap), 8)
    if tb_cap > 8:
        TB = min(TB, _round_up(-(-tb_cap // 2), 8))
    B_pad = _round_up(B, TB)
    pad = B_pad - B

    def prep(x, dt):
        x = x.astype(dt)
        if pad:
            x = jnp.pad(x, ((0, pad), (0, 0)))
        return x

    h_p = prep(head, stream_dtype)
    t_p = prep(tail, stream_dtype)
    idx_p = prep(batch_inputs[:, 1:2].astype(jnp.int32), jnp.int32)   # (B_pad, 1)

    smem = pl.BlockSpec(memory_space=pltpu.MemorySpace.SMEM)
    out = pl.pallas_call(
        _make_convkb_kernel(C, compute_dtype),
        out_shape=jax.ShapeDtypeStruct((B_pad, 1), jnp.float32),
        grid=(B_pad // TB,),
        in_specs=[
            smem, smem, smem,                               # cw, cb, fcb
            pl.BlockSpec((TB, 1), lambda i: (i, 0)),        # relation index column
            pl.BlockSpec((TB, D), lambda i: (i, 0)),        # head (streamed)
            pl.BlockSpec((TB, D), lambda i: (i, 0)),        # tail (streamed)
            pl.BlockSpec((R, D), lambda i: (0, 0)),         # relation table (resident)
            pl.BlockSpec((C, D), lambda i: (0, 0)),         # fc weight rows (resident)
        ],
        out_specs=pl.BlockSpec((TB, 1), lambda i: (i, 0)),
        compiler_params=pltpu.CompilerParams(
            dimension_semantics=("parallel",),              # megacore sharding on v7x
            vmem_limit_bytes=vmem_limit_bytes,
        ),
    )(cw, cb, fcb, idx_p, h_p, t_p, rel_table, fcw)
    return out[:B]


if __name__ == "__main__":
    key = jax.random.PRNGKey(0)
    B = 20                          # pads to 24 rows -> 3 grid steps with batch_tile=8
    bert_dim = 1024                 # hardcoded in the PyTorch module
    rel_emb_dim = 128
    input_dim = rel_emb_dim + bert_dim   # D = 1152
    input_seq_len = 3
    out_channels = 8
    num_relation = 8

    k = jax.random.split(key, 8)
    head = jax.random.normal(k[0], (B, input_dim), jnp.float32)
    tail = jax.random.normal(k[1], (B, input_dim), jnp.float32)
    relation_embeddings = jax.random.normal(k[2], (num_relation, rel_emb_dim),
                                            jnp.float32)

    # w_relation: xavier_normal-style init, padding_idx=0 row zeroed.
    std_wr = (2.0 / (num_relation + bert_dim)) ** 0.5
    w_relation = jax.random.normal(k[3], (num_relation, bert_dim),
                                   jnp.float32) * std_wr
    w_relation = w_relation.at[0].set(0.0)

    batch_inputs = jax.random.randint(k[4], (B, 3), 0, num_relation, jnp.int32)

    # conv weight (C, 1, 1, 3): xavier_uniform with gain 1.414
    fan_in_c, fan_out_c = 1 * 1 * input_seq_len, out_channels * 1 * input_seq_len
    bound_c = 1.414 * (6.0 / (fan_in_c + fan_out_c)) ** 0.5
    conv_w = jax.random.uniform(k[5], (out_channels, 1, 1, input_seq_len),
                                jnp.float32, -bound_c, bound_c)
    conv_b = jnp.zeros((out_channels,), jnp.float32)

    # fc weight (1, C*D): xavier_uniform with gain 1.414
    fan_in_f, fan_out_f = input_dim * out_channels, 1
    bound_f = 1.414 * (6.0 / (fan_in_f + fan_out_f)) ** 0.5
    fc_w = jax.random.uniform(k[6], (1, input_dim * out_channels),
                              jnp.float32, -bound_f, bound_f)
    fc_b = jnp.zeros((1,), jnp.float32)

    # Default path: f32 streams + f32 VPU math (small tile exercises grid+padding).
    out = convkb_bert_forward(head, tail, relation_embeddings, w_relation,
                              batch_inputs, conv_w, conv_b, fc_w, fc_b,
                              batch_tile=8)
    out = jax.block_until_ready(out)

    # Reference: straight float64 numpy version of the PyTorch forward.
    idx = np.asarray(batch_inputs[:, 1])
    rel = np.concatenate([np.asarray(relation_embeddings, np.float64)[idx],
                          np.asarray(w_relation, np.float64)[idx]], axis=1)
    cw_np = np.asarray(conv_w, np.float64).reshape(out_channels, 3)
    conv = (np.asarray(head, np.float64)[:, None, :] * cw_np[None, :, 0:1]
            + rel[:, None, :] * cw_np[None, :, 1:2]
            + np.asarray(tail, np.float64)[:, None, :] * cw_np[None, :, 2:3]
            + np.asarray(conv_b, np.float64)[None, :, None])          # (B, C, D)
    act = np.maximum(conv, 0.0)
    ref = (act.reshape(B, -1) @ np.asarray(fc_w, np.float64).reshape(-1, 1)
           + np.asarray(fc_b, np.float64))

    assert out.shape == (B, 1)
    out64 = np.asarray(out, np.float64)
    err = np.abs(out64 - ref).max()
    # f32 VPU path; only the in-kernel one-hot relation gather may see bf16
    # operand rounding on the MXU at default precision.
    assert np.allclose(out64, ref, rtol=1e-2, atol=1e-2), err

    # bf16 streams + bf16 VPU math (v6e/v7x fast path).
    out_bf = convkb_bert_forward(head, tail, relation_embeddings, w_relation,
                                 batch_inputs, conv_w, conv_b, fc_w, fc_b,
                                 stream_dtype=jnp.bfloat16,
                                 compute_dtype=jnp.bfloat16, batch_tile=8)
    out_bf = jax.block_until_ready(out_bf)
    assert np.allclose(np.asarray(out_bf, np.float64), ref, rtol=6e-2, atol=6e-2)

    print("KERNEL_OK")
</pallas_src>

<mosaic_0001>
module attributes {stable_mosaic.version = 11 : i64} {
  func.func @kernel(%arg0: i32, %arg1: memref<8x3xf32, #tpu.memory_space<smem>>, %arg2: memref<8xf32, #tpu.memory_space<smem>>, %arg3: memref<1xf32, #tpu.memory_space<smem>>, %arg4: memref<8x1xi32, #tpu.memory_space<vmem>>, %arg5: memref<8x1152xf32, #tpu.memory_space<vmem>>, %arg6: memref<8x1152xf32, #tpu.memory_space<vmem>>, %arg7: memref<8x1152xf32, #tpu.memory_space<vmem>>, %arg8: memref<8x1152xf32, #tpu.memory_space<vmem>>, %arg9: memref<8x1xf32, #tpu.memory_space<vmem>>) attributes {dimension_semantics = [#tpu.dimension_semantics<parallel>], iteration_bounds = array<i64: 3>, scalar_prefetch = 0 : i64, scratch_operands = 0 : i64, tpu.core_type = #tpu.core_type<tc>, window_params = [{transform_indices = @transform_0, window_bounds = array<i64: 8, 3>}, {transform_indices = @transform_1, window_bounds = array<i64: 8>}, {transform_indices = @transform_2, window_bounds = array<i64: 1>}, {transform_indices = @transform_3, window_bounds = array<i64: 8, 1>}, {transform_indices = @transform_4, window_bounds = array<i64: 8, 1152>}, {transform_indices = @transform_5, window_bounds = array<i64: 8, 1152>}, {pipeline_mode = #tpu.pipeline_mode<synchronous>, transform_indices = @transform_6, window_bounds = array<i64: 8, 1152>}, {pipeline_mode = #tpu.pipeline_mode<synchronous>, transform_indices = @transform_7, window_bounds = array<i64: 8, 1152>}, {transform_indices = @transform_8, window_bounds = array<i64: 8, 1>}]} {
    %c0 = arith.constant 0 : index
    %c0_0 = arith.constant 0 : index
    %0 = vector.load %arg7[%c0, %c0_0] : memref<8x1152xf32, #tpu.memory_space<vmem>>, vector<8x1152xf32>
    %c0_1 = arith.constant 0 : index
    %c0_2 = arith.constant 0 : index
    %1 = vector.load %arg4[%c0_1, %c0_2] : memref<8x1xi32, #tpu.memory_space<vmem>>, vector<8x1xi32>
    %2 = tpu.iota {dimensions = array<i32: 1>} : vector<8x8xi32>
    %3 = vector.broadcast %1 : vector<8x1xi32> to vector<8x8xi32>
    %4 = arith.cmpi eq, %3, %2 : vector<8x8xi32>
    %5 = arith.extui %4 : vector<8x8xi1> to vector<8x8xi32>
    %6 = arith.sitofp %5 : vector<8x8xi32> to vector<8x8xf32>
    %cst = arith.constant dense<0.000000e+00> : vector<8x1152xf32>
    %7 = tpu.matmul %6, %0, %cst {dimension_numbers = #tpu.dot_dimension_numbers<[1], [0], [0], [1], [0, 0, 1, 1], [], []>} : vector<8x8xf32>, vector<8x1152xf32>, vector<8x1152xf32> -> vector<8x1152xf32>
    %c0_3 = arith.constant 0 : index
    %c0_4 = arith.constant 0 : index
    %8 = vector.load %arg5[%c0_3, %c0_4] : memref<8x1152xf32, #tpu.memory_space<vmem>>, vector<8x1152xf32>
    %c0_5 = arith.constant 0 : index
    %c0_6 = arith.constant 0 : index
    %9 = vector.load %arg6[%c0_5, %c0_6] : memref<8x1152xf32, #tpu.memory_space<vmem>>, vector<8x1152xf32>
    %cst_7 = arith.constant 0.000000e+00 : f32
    %10 = vector.broadcast %cst_7 : f32 to vector<8x1152xf32>
    %c0_i32 = arith.constant 0 : i32
    %11 = arith.index_cast %c0_i32 : i32 to index
    %c0_8 = arith.constant 0 : index
    %12 = memref.load %arg1[%11, %c0_8] : memref<8x3xf32, #tpu.memory_space<smem>>
    %13 = arith.index_cast %c0_i32 : i32 to index
    %c1 = arith.constant 1 : index
    %14 = memref.load %arg1[%13, %c1] : memref<8x3xf32, #tpu.memory_space<smem>>
    %15 = arith.index_cast %c0_i32 : i32 to index
    %c2 = arith.constant 2 : index
    %16 = memref.load %arg1[%15, %c2] : memref<8x3xf32, #tpu.memory_space<smem>>
    %17 = arith.index_cast %c0_i32 : i32 to index
    %18 = memref.load %arg2[%17] : memref<8xf32, #tpu.memory_space<smem>>
    %19 = vector.broadcast %12 : f32 to vector<8x1152xf32>
    %20 = arith.mulf %8, %19 : vector<8x1152xf32>
    %21 = vector.broadcast %14 : f32 to vector<8x1152xf32>
    %22 = arith.mulf %7, %21 : vector<8x1152xf32>
    %23 = arith.addf %20, %22 : vector<8x1152xf32>
    %24 = vector.broadcast %16 : f32 to vector<8x1152xf32>
    %25 = arith.mulf %9, %24 : vector<8x1152xf32>
    %26 = arith.addf %23, %25 : vector<8x1152xf32>
    %27 = vector.broadcast %18 : f32 to vector<8x1152xf32>
    %28 = arith.addf %26, %27 : vector<8x1152xf32>
    %cst_9 = arith.constant 0.000000e+00 : f32
    %29 = vector.broadcast %cst_9 : f32 to vector<8x1152xf32>
    %30 = arith.maximumf %28, %29 : vector<8x1152xf32>
    %31 = arith.index_cast %c0_i32 : i32 to index
    %c0_10 = arith.constant 0 : index
    %32 = vector.load %arg8[%31, %c0_10] : memref<8x1152xf32, #tpu.memory_space<vmem>>, vector<1x1152xf32>
    %33 = vector.broadcast %32 : vector<1x1152xf32> to vector<8x1152xf32>
    %34 = arith.mulf %30, %33 : vector<8x1152xf32>
    %35 = arith.addf %10, %34 : vector<8x1152xf32>
    %c1_i32 = arith.constant 1 : i32
    %36 = arith.index_cast %c1_i32 : i32 to index
    %c0_11 = arith.constant 0 : index
    %37 = memref.load %arg1[%36, %c0_11] : memref<8x3xf32, #tpu.memory_space<smem>>
    %38 = arith.index_cast %c1_i32 : i32 to index
    %c1_12 = arith.constant 1 : index
    %39 = memref.load %arg1[%38, %c1_12] : memref<8x3xf32, #tpu.memory_space<smem>>
    %40 = arith.index_cast %c1_i32 : i32 to index
    %c2_13 = arith.constant 2 : index
    %41 = memref.load %arg1[%40, %c2_13] : memref<8x3xf32, #tpu.memory_space<smem>>
    %42 = arith.index_cast %c1_i32 : i32 to index
    %43 = memref.load %arg2[%42] : memref<8xf32, #tpu.memory_space<smem>>
    %44 = vector.broadcast %37 : f32 to vector<8x1152xf32>
    %45 = arith.mulf %8, %44 : vector<8x1152xf32>
    %46 = vector.broadcast %39 : f32 to vector<8x1152xf32>
    %47 = arith.mulf %7, %46 : vector<8x1152xf32>
    %48 = arith.addf %45, %47 : vector<8x1152xf32>
    %49 = vector.broadcast %41 : f32 to vector<8x1152xf32>
    %50 = arith.mulf %9, %49 : vector<8x1152xf32>
    %51 = arith.addf %48, %50 : vector<8x1152xf32>
    %52 = vector.broadcast %43 : f32 to vector<8x1152xf32>
    %53 = arith.addf %51, %52 : vector<8x1152xf32>
    %cst_14 = arith.constant 0.000000e+00 : f32
    %54 = vector.broadcast %cst_14 : f32 to vector<8x1152xf32>
    %55 = arith.maximumf %53, %54 : vector<8x1152xf32>
    %56 = arith.index_cast %c1_i32 : i32 to index
    %c0_15 = arith.constant 0 : index
    %57 = vector.load %arg8[%56, %c0_15] : memref<8x1152xf32, #tpu.memory_space<vmem>>, vector<1x1152xf32>
    %58 = vector.broadcast %57 : vector<1x1152xf32> to vector<8x1152xf32>
    %59 = arith.mulf %55, %58 : vector<8x1152xf32>
    %60 = arith.addf %35, %59 : vector<8x1152xf32>
    %c2_i32 = arith.constant 2 : i32
    %61 = arith.index_cast %c2_i32 : i32 to index
    %c0_16 = arith.constant 0 : index
    %62 = memref.load %arg1[%61, %c0_16] : memref<8x3xf32, #tpu.memory_space<smem>>
    %63 = arith.index_cast %c2_i32 : i32 to index
    %c1_17 = arith.constant 1 : index
    %64 = memref.load %arg1[%63, %c1_17] : memref<8x3xf32, #tpu.memory_space<smem>>
    %65 = arith.index_cast %c2_i32 : i32 to index
    %c2_18 = arith.constant 2 : index
    %66 = memref.load %arg1[%65, %c2_18] : memref<8x3xf32, #tpu.memory_space<smem>>
    %67 = arith.index_cast %c2_i32 : i32 to index
    %68 = memref.load %arg2[%67] : memref<8xf32, #tpu.memory_space<smem>>
    %69 = vector.broadcast %62 : f32 to vector<8x1152xf32>
    %70 = arith.mulf %8, %69 : vector<8x1152xf32>
    %71 = vector.broadcast %64 : f32 to vector<8x1152xf32>
    %72 = arith.mulf %7, %71 : vector<8x1152xf32>
    %73 = arith.addf %70, %72 : vector<8x1152xf32>
    %74 = vector.broadcast %66 : f32 to vector<8x1152xf32>
    %75 = arith.mulf %9, %74 : vector<8x1152xf32>
    %76 = arith.addf %73, %75 : vector<8x1152xf32>
    %77 = vector.broadcast %68 : f32 to vector<8x1152xf32>
    %78 = arith.addf %76, %77 : vector<8x1152xf32>
    %cst_19 = arith.constant 0.000000e+00 : f32
    %79 = vector.broadcast %cst_19 : f32 to vector<8x1152xf32>
    %80 = arith.maximumf %78, %79 : vector<8x1152xf32>
    %81 = arith.index_cast %c2_i32 : i32 to index
    %c0_20 = arith.constant 0 : index
    %82 = vector.load %arg8[%81, %c0_20] : memref<8x1152xf32, #tpu.memory_space<vmem>>, vector<1x1152xf32>
    %83 = vector.broadcast %82 : vector<1x1152xf32> to vector<8x1152xf32>
    %84 = arith.mulf %80, %83 : vector<8x1152xf32>
    %85 = arith.addf %60, %84 : vector<8x1152xf32>
    %c3_i32 = arith.constant 3 : i32
    %86 = arith.index_cast %c3_i32 : i32 to index
    %c0_21 = arith.constant 0 : index
    %87 = memref.load %arg1[%86, %c0_21] : memref<8x3xf32, #tpu.memory_space<smem>>
    %88 = arith.index_cast %c3_i32 : i32 to index
    %c1_22 = arith.constant 1 : index
    %89 = memref.load %arg1[%88, %c1_22] : memref<8x3xf32, #tpu.memory_space<smem>>
    %90 = arith.index_cast %c3_i32 : i32 to index
    %c2_23 = arith.constant 2 : index
    %91 = memref.load %arg1[%90, %c2_23] : memref<8x3xf32, #tpu.memory_space<smem>>
    %92 = arith.index_cast %c3_i32 : i32 to index
    %93 = memref.load %arg2[%92] : memref<8xf32, #tpu.memory_space<smem>>
    %94 = vector.broadcast %87 : f32 to vector<8x1152xf32>
    %95 = arith.mulf %8, %94 : vector<8x1152xf32>
    %96 = vector.broadcast %89 : f32 to vector<8x1152xf32>
    %97 = arith.mulf %7, %96 : vector<8x1152xf32>
    %98 = arith.addf %95, %97 : vector<8x1152xf32>
    %99 = vector.broadcast %91 : f32 to vector<8x1152xf32>
    %100 = arith.mulf %9, %99 : vector<8x1152xf32>
    %101 = arith.addf %98, %100 : vector<8x1152xf32>
    %102 = vector.broadcast %93 : f32 to vector<8x1152xf32>
    %103 = arith.addf %101, %102 : vector<8x1152xf32>
    %cst_24 = arith.constant 0.000000e+00 : f32
    %104 = vector.broadcast %cst_24 : f32 to vector<8x1152xf32>
    %105 = arith.maximumf %103, %104 : vector<8x1152xf32>
    %106 = arith.index_cast %c3_i32 : i32 to index
    %c0_25 = arith.constant 0 : index
    %107 = vector.load %arg8[%106, %c0_25] : memref<8x1152xf32, #tpu.memory_space<vmem>>, vector<1x1152xf32>
    %108 = vector.broadcast %107 : vector<1x1152xf32> to vector<8x1152xf32>
    %109 = arith.mulf %105, %108 : vector<8x1152xf32>
    %110 = arith.addf %85, %109 : vector<8x1152xf32>
    %c4_i32 = arith.constant 4 : i32
    %111 = arith.index_cast %c4_i32 : i32 to index
    %c0_26 = arith.constant 0 : index
    %112 = memref.load %arg1[%111, %c0_26] : memref<8x3xf32, #tpu.memory_space<smem>>
    %113 = arith.index_cast %c4_i32 : i32 to index
    %c1_27 = arith.constant 1 : index
    %114 = memref.load %arg1[%113, %c1_27] : memref<8x3xf32, #tpu.memory_space<smem>>
    %115 = arith.index_cast %c4_i32 : i32 to index
    %c2_28 = arith.constant 2 : index
    %116 = memref.load %arg1[%115, %c2_28] : memref<8x3xf32, #tpu.memory_space<smem>>
    %117 = arith.index_cast %c4_i32 : i32 to index
    %118 = memref.load %arg2[%117] : memref<8xf32, #tpu.memory_space<smem>>
    %119 = vector.broadcast %112 : f32 to vector<8x1152xf32>
    %120 = arith.mulf %8, %119 : vector<8x1152xf32>
    %121 = vector.broadcast %114 : f32 to vector<8x1152xf32>
    %122 = arith.mulf %7, %121 : vector<8x1152xf32>
    %123 = arith.addf %120, %122 : vector<8x1152xf32>
    %124 = vector.broadcast %116 : f32 to vector<8x1152xf32>
    %125 = arith.mulf %9, %124 : vector<8x1152xf32>
    %126 = arith.addf %123, %125 : vector<8x1152xf32>
    %127 = vector.broadcast %118 : f32 to vector<8x1152xf32>
    %128 = arith.addf %126, %127 : vector<8x1152xf32>
    %cst_29 = arith.constant 0.000000e+00 : f32
    %129 = vector.broadcast %cst_29 : f32 to vector<8x1152xf32>
    %130 = arith.maximumf %128, %129 : vector<8x1152xf32>
    %131 = arith.index_cast %c4_i32 : i32 to index
    %c0_30 = arith.constant 0 : index
    %132 = vector.load %arg8[%131, %c0_30] : memref<8x1152xf32, #tpu.memory_space<vmem>>, vector<1x1152xf32>
    %133 = vector.broadcast %132 : vector<1x1152xf32> to vector<8x1152xf32>
    %134 = arith.mulf %130, %133 : vector<8x1152xf32>
    %135 = arith.addf %110, %134 : vector<8x1152xf32>
    %c5_i32 = arith.constant 5 : i32
    %136 = arith.index_cast %c5_i32 : i32 to index
    %c0_31 = arith.constant 0 : index
    %137 = memref.load %arg1[%136, %c0_31] : memref<8x3xf32, #tpu.memory_space<smem>>
    %138 = arith.index_cast %c5_i32 : i32 to index
    %c1_32 = arith.constant 1 : index
    %139 = memref.load %arg1[%138, %c1_32] : memref<8x3xf32, #tpu.memory_space<smem>>
    %140 = arith.index_cast %c5_i32 : i32 to index
    %c2_33 = arith.constant 2 : index
    %141 = memref.load %arg1[%140, %c2_33] : memref<8x3xf32, #tpu.memory_space<smem>>
    %142 = arith.index_cast %c5_i32 : i32 to index
    %143 = memref.load %arg2[%142] : memref<8xf32, #tpu.memory_space<smem>>
    %144 = vector.broadcast %137 : f32 to vector<8x1152xf32>
    %145 = arith.mulf %8, %144 : vector<8x1152xf32>
    %146 = vector.broadcast %139 : f32 to vector<8x1152xf32>
    %147 = arith.mulf %7, %146 : vector<8x1152xf32>
    %148 = arith.addf %145, %147 : vector<8x1152xf32>
    %149 = vector.broadcast %141 : f32 to vector<8x1152xf32>
    %150 = arith.mulf %9, %149 : vector<8x1152xf32>
    %151 = arith.addf %148, %150 : vector<8x1152xf32>
    %152 = vector.broadcast %143 : f32 to vector<8x1152xf32>
    %153 = arith.addf %151, %152 : vector<8x1152xf32>
    %cst_34 = arith.constant 0.000000e+00 : f32
    %154 = vector.broadcast %cst_34 : f32 to vector<8x1152xf32>
    %155 = arith.maximumf %153, %154 : vector<8x1152xf32>
    %156 = arith.index_cast %c5_i32 : i32 to index
    %c0_35 = arith.constant 0 : index
    %157 = vector.load %arg8[%156, %c0_35] : memref<8x1152xf32, #tpu.memory_space<vmem>>, vector<1x1152xf32>
    %158 = vector.broadcast %157 : vector<1x1152xf32> to vector<8x1152xf32>
    %159 = arith.mulf %155, %158 : vector<8x1152xf32>
    %160 = arith.addf %135, %159 : vector<8x1152xf32>
    %c6_i32 = arith.constant 6 : i32
    %161 = arith.index_cast %c6_i32 : i32 to index
    %c0_36 = arith.constant 0 : index
    %162 = memref.load %arg1[%161, %c0_36] : memref<8x3xf32, #tpu.memory_space<smem>>
    %163 = arith.index_cast %c6_i32 : i32 to index
    %c1_37 = arith.constant 1 : index
    %164 = memref.load %arg1[%163, %c1_37] : memref<8x3xf32, #tpu.memory_space<smem>>
    %165 = arith.index_cast %c6_i32 : i32 to index
    %c2_38 = arith.constant 2 : index
    %166 = memref.load %arg1[%165, %c2_38] : memref<8x3xf32, #tpu.memory_space<smem>>
    %167 = arith.index_cast %c6_i32 : i32 to index
    %168 = memref.load %arg2[%167] : memref<8xf32, #tpu.memory_space<smem>>
    %169 = vector.broadcast %162 : f32 to vector<8x1152xf32>
    %170 = arith.mulf %8, %169 : vector<8x1152xf32>
    %171 = vector.broadcast %164 : f32 to vector<8x1152xf32>
    %172 = arith.mulf %7, %171 : vector<8x1152xf32>
    %173 = arith.addf %170, %172 : vector<8x1152xf32>
    %174 = vector.broadcast %166 : f32 to vector<8x1152xf32>
    %175 = arith.mulf %9, %174 : vector<8x1152xf32>
    %176 = arith.addf %173, %175 : vector<8x1152xf32>
    %177 = vector.broadcast %168 : f32 to vector<8x1152xf32>
    %178 = arith.addf %176, %177 : vector<8x1152xf32>
    %cst_39 = arith.constant 0.000000e+00 : f32
    %179 = vector.broadcast %cst_39 : f32 to vector<8x1152xf32>
    %180 = arith.maximumf %178, %179 : vector<8x1152xf32>
    %181 = arith.index_cast %c6_i32 : i32 to index
    %c0_40 = arith.constant 0 : index
    %182 = vector.load %arg8[%181, %c0_40] : memref<8x1152xf32, #tpu.memory_space<vmem>>, vector<1x1152xf32>
    %183 = vector.broadcast %182 : vector<1x1152xf32> to vector<8x1152xf32>
    %184 = arith.mulf %180, %183 : vector<8x1152xf32>
    %185 = arith.addf %160, %184 : vector<8x1152xf32>
    %c7_i32 = arith.constant 7 : i32
    %186 = arith.index_cast %c7_i32 : i32 to index
    %c0_41 = arith.constant 0 : index
    %187 = memref.load %arg1[%186, %c0_41] : memref<8x3xf32, #tpu.memory_space<smem>>
    %188 = arith.index_cast %c7_i32 : i32 to index
    %c1_42 = arith.constant 1 : index
    %189 = memref.load %arg1[%188, %c1_42] : memref<8x3xf32, #tpu.memory_space<smem>>
    %190 = arith.index_cast %c7_i32 : i32 to index
    %c2_43 = arith.constant 2 : index
    %191 = memref.load %arg1[%190, %c2_43] : memref<8x3xf32, #tpu.memory_space<smem>>
    %192 = arith.index_cast %c7_i32 : i32 to index
    %193 = memref.load %arg2[%192] : memref<8xf32, #tpu.memory_space<smem>>
    %194 = vector.broadcast %187 : f32 to vector<8x1152xf32>
    %195 = arith.mulf %8, %194 : vector<8x1152xf32>
    %196 = vector.broadcast %189 : f32 to vector<8x1152xf32>
    %197 = arith.mulf %7, %196 : vector<8x1152xf32>
    %198 = arith.addf %195, %197 : vector<8x1152xf32>
    %199 = vector.broadcast %191 : f32 to vector<8x1152xf32>
    %200 = arith.mulf %9, %199 : vector<8x1152xf32>
    %201 = arith.addf %198, %200 : vector<8x1152xf32>
    %202 = vector.broadcast %193 : f32 to vector<8x1152xf32>
    %203 = arith.addf %201, %202 : vector<8x1152xf32>
    %cst_44 = arith.constant 0.000000e+00 : f32
    %204 = vector.broadcast %cst_44 : f32 to vector<8x1152xf32>
    %205 = arith.maximumf %203, %204 : vector<8x1152xf32>
    %206 = arith.index_cast %c7_i32 : i32 to index
    %c0_45 = arith.constant 0 : index
    %207 = vector.load %arg8[%206, %c0_45] : memref<8x1152xf32, #tpu.memory_space<vmem>>, vector<1x1152xf32>
    %208 = vector.broadcast %207 : vector<1x1152xf32> to vector<8x1152xf32>
    %209 = arith.mulf %205, %208 : vector<8x1152xf32>
    %210 = arith.addf %185, %209 : vector<8x1152xf32>
    %c8_i32 = arith.constant 8 : i32
    %cst_46 = arith.constant dense<0.000000e+00> : vector<8xf32>
    %211 = vector.multi_reduction <add>, %210, %cst_46 [1] : vector<8x1152xf32> to vector<8xf32>
    %212 = vector.shape_cast %211 : vector<8xf32> to vector<8x1xf32>
    %c0_47 = arith.constant 0 : index
    %213 = memref.load %arg3[%c0_47] : memref<1xf32, #tpu.memory_space<smem>>
    %214 = vector.broadcast %213 : f32 to vector<8x1xf32>
    %215 = arith.addf %212, %214 : vector<8x1xf32>
    %c0_48 = arith.constant 0 : index
    %c0_49 = arith.constant 0 : index
    %216 = vector.load %arg9[%c0_48, %c0_49] : memref<8x1xf32, #tpu.memory_space<vmem>>, vector<8x1xf32>
    tpu.vector_store %arg9[%c0_48, %c0_49], %215 {strides = array<i32>} : memref<8x1xf32, #tpu.memory_space<vmem>>, vector<8x1xf32>,
    return
  }
  func.func @transform_0(%arg0: i32) -> (i32, i32) {
    %c0_i32 = arith.constant 0 : i32
    %c0_i32_0 = arith.constant 0 : i32
    %c0_i32_1 = arith.constant 0 : i32
    return %c0_i32, %c0_i32_0 : i32, i32
  }
  func.func @transform_1(%arg0: i32) -> i32 {
    %c0_i32 = arith.constant 0 : i32
    %c0_i32_0 = arith.constant 0 : i32
    return %c0_i32 : i32
  }
  func.func @transform_2(%arg0: i32) -> i32 {
    %c0_i32 = arith.constant 0 : i32
    %c0_i32_0 = arith.constant 0 : i32
    return %c0_i32 : i32
  }
  func.func @transform_3(%arg0: i32) -> (i32, i32) {
    %c0_i32 = arith.constant 0 : i32
    %c0_i32_0 = arith.constant 0 : i32
    return %arg0, %c0_i32 : i32, i32
  }
  func.func @transform_4(%arg0: i32) -> (i32, i32) {
    %c0_i32 = arith.constant 0 : i32
    %c0_i32_0 = arith.constant 0 : i32
    return %arg0, %c0_i32 : i32, i32
  }
  func.func @transform_5(%arg0: i32) -> (i32, i32) {
    %c0_i32 = arith.constant 0 : i32
    %c0_i32_0 = arith.constant 0 : i32
    return %arg0, %c0_i32 : i32, i32
  }
  func.func @transform_6(%arg0: i32) -> (i32, i32) {
    %c0_i32 = arith.constant 0 : i32
    %c0_i32_0 = arith.constant 0 : i32
    %c0_i32_1 = arith.constant 0 : i32
    return %c0_i32, %c0_i32_0 : i32, i32
  }
  func.func @transform_7(%arg0: i32) -> (i32, i32) {
    %c0_i32 = arith.constant 0 : i32
    %c0_i32_0 = arith.constant 0 : i32
    %c0_i32_1 = arith.constant 0 : i32
    return %c0_i32, %c0_i32_0 : i32, i32
  }
  func.func @transform_8(%arg0: i32) -> (i32, i32) {
    %c0_i32 = arith.constant 0 : i32
    %c0_i32_0 = arith.constant 0 : i32
    return %arg0, %c0_i32 : i32, i32
  }
}

</mosaic_0001>

<llo_original>
// kernel: tpu_custom_call.1
$region0: #{tpu_custom_call.1}
  #allocation0 [shape = 'u32[]', space=smem, size = 0x4, offset = 0x4, fixed_abs, tag = 'smem constant byte address 0x4 - core index']
  #allocation1 [shape = 'u32[144,128]{1,0:T(1,128)}', space=vmem, size = 0x12000, scoped, tag = 'internal scratch']
  #allocation2 [shape = 'f32[1]{0:T(128)S(6)}', space=smem, size = 0x200, scoped, tag = 'scoped memory for tpu_custom_call.1']
  %s0 = inlined_call_operand.vmem [shape: f32[8,3], index: 0, kind: input, shape index: {}]
  %s1 = inlined_call_operand.vmem [shape: f32[8], index: 1, kind: input, shape index: {}]
  %s2 = inlined_call_operand.<no memory space> [shape: f32[1], index: 2, kind: input, shape index: {}]
  %s3 = inlined_call_operand.vmem [shape: s32[24,1], index: 3, kind: input, shape index: {}]
  %s4 = inlined_call_operand.hbm [shape: f32[24,1152], index: 4, kind: input, shape index: {}]
  %s5 = inlined_call_operand.hbm [shape: f32[24,1152], index: 5, kind: input, shape index: {}]
  %s6 = inlined_call_operand.hbm [shape: f32[8,1152], index: 6, kind: input, shape index: {}]
  %s7 = inlined_call_operand.hbm [shape: f32[8,1152], index: 7, kind: input, shape index: {}]
  %s8 = inlined_call_operand.vmem [shape: f32[24,1], index: 8, kind: output, shape index: {}]
  %s9 = sld [smem:[#allocation0]]
  $region89: #{tpu_custom_call.1} parent=0
    _
  %s11 = ssub.s32 1, %s9
  %s12 = scalar_select 0, %s11, %s9
  %13 = sst [smem:[#allocation2]] %s2
  $region1: #{tpu_custom_call.1} parent=0
    #allocation3 [shape = 'u8[4096]{0}', space=smem, size = 0x1000, scoped, tag = 'input window, operand 0, single buffered']
    #allocation4 [shape = 's32[2]{0}', space=sflag, size = 0x8, scoped, tag = 'scoped memory for tpu_custom_call.1']
    #allocation5 [shape = 's32[2]{0}', space=sflag, size = 0x8, scoped, tag = 'scoped memory for tpu_custom_call.1']
    #allocation6 [shape = 'u8[512]{0}', space=smem, size = 0x200, scoped, tag = 'input window, operand 1, single buffered']
    #allocation7 [shape = 's32[1]{0}', space=sflag, size = 0x4, scoped, tag = 'scoped memory for tpu_custom_call.1']
    #allocation8 [shape = 'u8[73728]{0}', space=vmem, size = 0x12000, scoped, tag = 'input window, operand 4']
    #allocation9 [shape = 'u8[73728]{0}', space=vmem, size = 0x12000, scoped, tag = 'input window, operand 5']
    #allocation10 [shape = 's32[2]{0}', space=sflag, size = 0x8, scoped, tag = 'scoped memory for tpu_custom_call.1']
    #allocation11 [shape = 'u8[36864]{0}', space=vmem, size = 0x9000, scoped, tag = 'input window, operand 6, single buffered']
    #allocation12 [shape = 'u8[36864]{0}', space=vmem, size = 0x9000, scoped, tag = 'input window, operand 7, single buffered']
    #allocation13 [shape = 's32[1]{0}', space=sflag, size = 0x4, scoped, tag = 'scoped memory for tpu_custom_call.1']
    %14 = vsyncpa [#allocation5], 0
    %15 = vsyncpa [#allocation7], 0
    %16 = vsyncpa [#allocation4], 0
    %s17 = scalar_lea.sflag [#allocation4], 1
    %18 = vsyncpa %s17, 0
    %19 = vsyncpa [#allocation10], 0
    %s20 = scalar_lea.sflag [#allocation10], 1
    %21 = vsyncpa %s20, 0
    %22 = vsyncpa [#allocation13], 0
    loop: start=0, step=1, limit=5
    $region2: #{tpu_custom_call.1} parent=1 // loop_pre_header
      _
    $region3: #{tpu_custom_call.1} parent=1 // loop_header
      %s24 = sphi 0, %s28
      %p25 = scmp.ge.s32.totalorder %s24, 5
      %s32 = sphi 0, %s32
      %s34 = sphi 0, %s32
      %s35 = sphi 0, %s34
      %s49 = sphi 0, %s35
      %s53 = sphi 0, %s53
      %s55 = sphi 0, %s53
      %s56 = sphi 0, %s55
      %s70 = sphi 0, %s56
      %s74 = sphi 0, %s74
      %s76 = sphi 0, %s74
      %s77 = sphi 0, %s76
      %s91 = sphi 0, %s77
      %s97 = sphi 0, %s99
      %s100 = sphi 0, %s97
      %s101 = sphi 0, %s100
      %s117 = sphi 0, %s101
      %s123 = sphi 0, %s125
      %s126 = sphi 0, %s123
      %s127 = sphi 0, %s126
      %s143 = sphi 0, %s127
      %s149 = sphi 0, %s151
      %s152 = sphi 0, %s149
      %s153 = sphi 0, %s152
      %s169 = sphi 0, %s153
      %s173 = sphi 0, %s173
      %s175 = sphi 0, %s173
      %s176 = sphi 0, %s175
      %s190 = sphi 0, %s176
      %s194 = sphi 0, %s194
      %s196 = sphi 0, %s194
      %s197 = sphi 0, %s196
      %s211 = sphi 0, %s197
      %s217 = sphi 0, %s219
      %s220 = sphi 0, %s217
      %s221 = sphi 0, %s220
      %s237 = sphi 0, %s221
    $region4: #{tpu_custom_call.1} parent=1 // loop_header_branch
      %27 = sbr.rel (%p25) target = $region8
    $region5: #{tpu_custom_call.1} parent=1 // loop_body
      %s29 = ssub.s32 %s24, 1
      %s30 = ssub.s32 %s24, 2
      %s31 = sadd.s32 %s24, 1
      %s33 = sadd.s32 %s32, 1
      %p36 = scmp.eq.s32.totalorder %s24, 2
      %p37 = scmp.ne.s32.totalorder %s32, %s34
      %p38 = scmp.eq.s32.totalorder %s24, 0
      %p39 = por %p37, %p38
      %p40 = scmp.ne.s32.totalorder %s32, %s34
      %p41 = scmp.eq.s32.totalorder %s29, 2
      %p42 = por %p40, %p41
      %p43 = scmp.ne.s32.totalorder %s34, %s35
      %p44 = scmp.eq.s32.totalorder %s29, 0
      %p45 = por %p43, %p44
      %p46 = scmp.ne.s32.totalorder %s34, %s35
      %p47 = scmp.eq.s32.totalorder %s30, 2
      %p48 = por %p46, %p47
      %p50 = scmp.ne.s32.totalorder %s35, %s49
      %p51 = scmp.eq.s32.totalorder %s30, 0
      %p52 = por %p50, %p51
      %s54 = sadd.s32 %s53, 1
      %p57 = scmp.eq.s32.totalorder %s24, 2
      %p58 = scmp.ne.s32.totalorder %s53, %s55
      %p59 = scmp.eq.s32.totalorder %s24, 0
      %p60 = por %p58, %p59
      %p61 = scmp.ne.s32.totalorder %s53, %s55
      %p62 = scmp.eq.s32.totalorder %s29, 2
      %p63 = por %p61, %p62
      %p64 = scmp.ne.s32.totalorder %s55, %s56
      %p65 = scmp.eq.s32.totalorder %s29, 0
      %p66 = por %p64, %p65
      %p67 = scmp.ne.s32.totalorder %s55, %s56
      %p68 = scmp.eq.s32.totalorder %s30, 2
      %p69 = por %p67, %p68
      %p71 = scmp.ne.s32.totalorder %s56, %s70
      %p72 = scmp.eq.s32.totalorder %s30, 0
      %p73 = por %p71, %p72
      %s75 = sadd.s32 %s74, 1
      %p78 = scmp.eq.s32.totalorder %s24, 2
      %p79 = scmp.ne.s32.totalorder %s74, %s76
      %p80 = scmp.eq.s32.totalorder %s24, 0
      %p81 = por %p79, %p80
      %p82 = scmp.ne.s32.totalorder %s74, %s76
      %p83 = scmp.eq.s32.totalorder %s29, 2
      %p84 = por %p82, %p83
      %p85 = scmp.ne.s32.totalorder %s76, %s77
      %p86 = scmp.eq.s32.totalorder %s29, 0
      %p87 = por %p85, %p86
      %p88 = scmp.ne.s32.totalorder %s76, %s77
      %p89 = scmp.eq.s32.totalorder %s30, 2
      %p90 = por %p88, %p89
      %p92 = scmp.ne.s32.totalorder %s77, %s91
      %p93 = scmp.eq.s32.totalorder %s30, 0
      %p94 = por %p92, %p93
      %s95 = ssub.s32 %s24, %s31
      %p96 = scmp.eq.s32.totalorder %s95, 0
      %s98 = sadd.s32 %s97, 1
      %s99 = scalar_select %p96, %s97, %s98
      %p102 = pneg %p96
      %p103 = scmp.eq.s32.totalorder %s24, 2
      %p104 = por %p102, %p103
      %p105 = scmp.ne.s32.totalorder %s97, %s100
      %p106 = scmp.eq.s32.totalorder %s24, 0
      %p107 = por %p105, %p106
      %p108 = scmp.ne.s32.totalorder %s97, %s100
      %p109 = scmp.eq.s32.totalorder %s29, 2
      %p110 = por %p108, %p109
      %p111 = scmp.ne.s32.totalorder %s100, %s101
      %p112 = scmp.eq.s32.totalorder %s29, 0
      %p113 = por %p111, %p112
      %p114 = scmp.ne.s32.totalorder %s100, %s101
      %p115 = scmp.eq.s32.totalorder %s30, 2
      %p116 = por %p114, %p115
      %p118 = scmp.ne.s32.totalorder %s101, %s117
      %p119 = scmp.eq.s32.totalorder %s30, 0
      %p120 = por %p118, %p119
      %s121 = ssub.s32 %s24, %s31
      %p122 = scmp.eq.s32.totalorder %s121, 0
      %s124 = sadd.s32 %s123, 1
      %s125 = scalar_select %p122, %s123, %s124
      %p128 = pneg %p122
      %p129 = scmp.eq.s32.totalorder %s24, 2
      %p130 = por %p128, %p129
      %p131 = scmp.ne.s32.totalorder %s123, %s126
      %p132 = scmp.eq.s32.totalorder %s24, 0
      %p133 = por %p131, %p132
      %p134 = scmp.ne.s32.totalorder %s123, %s126
      %p135 = scmp.eq.s32.totalorder %s29, 2
      %p136 = por %p134, %p135
      %p137 = scmp.ne.s32.totalorder %s126, %s127
      %p138 = scmp.eq.s32.totalorder %s29, 0
      %p139 = por %p137, %p138
      %p140 = scmp.ne.s32.totalorder %s126, %s127
      %p141 = scmp.eq.s32.totalorder %s30, 2
      %p142 = por %p140, %p141
      %p144 = scmp.ne.s32.totalorder %s127, %s143
      %p145 = scmp.eq.s32.totalorder %s30, 0
      %p146 = por %p144, %p145
      %s147 = ssub.s32 %s24, %s31
      %p148 = scmp.eq.s32.totalorder %s147, 0
      %s150 = sadd.s32 %s149, 1
      %s151 = scalar_select %p148, %s149, %s150
      %p154 = pneg %p148
      %p155 = scmp.eq.s32.totalorder %s24, 2
      %p156 = por %p154, %p155
      %p157 = scmp.ne.s32.totalorder %s149, %s152
      %p158 = scmp.eq.s32.totalorder %s24, 0
      %p159 = por %p157, %p158
      %p160 = scmp.ne.s32.totalorder %s149, %s152
      %p161 = scmp.eq.s32.totalorder %s29, 2
      %p162 = por %p160, %p161
      %p163 = scmp.ne.s32.totalorder %s152, %s153
      %p164 = scmp.eq.s32.totalorder %s29, 0
      %p165 = por %p163, %p164
      %p166 = scmp.ne.s32.totalorder %s152, %s153
      %p167 = scmp.eq.s32.totalorder %s30, 2
      %p168 = por %p166, %p167
      %p170 = scmp.ne.s32.totalorder %s153, %s169
      %p171 = scmp.eq.s32.totalorder %s30, 0
      %p172 = por %p170, %p171
      %s174 = sadd.s32 %s173, 1
      %p177 = scmp.eq.s32.totalorder %s24, 2
      %p178 = scmp.ne.s32.totalorder %s173, %s175
      %p179 = scmp.eq.s32.totalorder %s24, 0
      %p180 = por %p178, %p179
      %p181 = scmp.ne.s32.totalorder %s173, %s175
      %p182 = scmp.eq.s32.totalorder %s29, 2
      %p183 = por %p181, %p182
      %p184 = scmp.ne.s32.totalorder %s175, %s176
      %p185 = scmp.eq.s32.totalorder %s29, 0
      %p186 = por %p184, %p185
      %p187 = scmp.ne.s32.totalorder %s175, %s176
      %p188 = scmp.eq.s32.totalorder %s30, 2
      %p189 = por %p187, %p188
      %p191 = scmp.ne.s32.totalorder %s176, %s190
      %p192 = scmp.eq.s32.totalorder %s30, 0
      %p193 = por %p191, %p192
      %s195 = sadd.s32 %s194, 1
      %p198 = scmp.eq.s32.totalorder %s24, 2
      %p199 = scmp.ne.s32.totalorder %s194, %s196
      %p200 = scmp.eq.s32.totalorder %s24, 0
      %p201 = por %p199, %p200
      %p202 = scmp.ne.s32.totalorder %s194, %s196
      %p203 = scmp.eq.s32.totalorder %s29, 2
      %p204 = por %p202, %p203
      %p205 = scmp.ne.s32.totalorder %s196, %s197
      %p206 = scmp.eq.s32.totalorder %s29, 0
      %p207 = por %p205, %p206
      %p208 = scmp.ne.s32.totalorder %s196, %s197
      %p209 = scmp.eq.s32.totalorder %s30, 2
      %p210 = por %p208, %p209
      %p212 = scmp.ne.s32.totalorder %s197, %s211
      %p213 = scmp.eq.s32.totalorder %s30, 0
      %p214 = por %p212, %p213
      %s215 = ssub.s32 %s24, %s31
      %p216 = scmp.eq.s32.totalorder %s215, 0
      %s218 = sadd.s32 %s217, 1
      %s219 = scalar_select %p216, %s217, %s218
      %p222 = pneg %p216
      %p223 = scmp.eq.s32.totalorder %s24, 2
      %p224 = por %p222, %p223
      %p225 = scmp.ne.s32.totalorder %s217, %s220
      %p226 = scmp.eq.s32.totalorder %s24, 0
      %p227 = por %p225, %p226
      %p228 = scmp.ne.s32.totalorder %s217, %s220
      %p229 = scmp.eq.s32.totalorder %s29, 2
      %p230 = por %p228, %p229
      %p231 = scmp.ne.s32.totalorder %s220, %s221
      %p232 = scmp.eq.s32.totalorder %s29, 0
      %p233 = por %p231, %p232
      %p234 = scmp.ne.s32.totalorder %s220, %s221
      %p235 = scmp.eq.s32.totalorder %s30, 2
      %p236 = por %p234, %p235
      %p238 = scmp.ne.s32.totalorder %s221, %s237
      %p239 = scmp.eq.s32.totalorder %s30, 0
      %p240 = por %p238, %p239
      %p241 = scmp.le.s32.totalorder 1, %s24
      %p242 = scmp.lt.s32.totalorder %s24, 4
      %p243 = pnand %p241, %p242
      %p244 = pneg %p243
      // Predicated region
      $region9: #{tpu_custom_call.1} parent=5 // pred_check
        _
      $region10: #{tpu_custom_call.1} parent=5 // pred_check_branch
        %246 = sbr.rel (%p243) target = $region12
      $region11: #{tpu_custom_call.1} parent=5 // pred_region
        %s247 = ssub.s32 %s24, 1
        // Predicated region
        $region13: #{tpu_custom_call.1} parent=11 // pred_check
          %p248 = pneg %p45
        $region14: #{tpu_custom_call.1} parent=11 // pred_check_branch
          %250 = sbr.rel (%p248) target = $region16
        $region15: #{tpu_custom_call.1} parent=11 // pred_region
          %s252 = ssub.s32 128, 128
          %253 = vsyncadd [#allocation5], %s252
          %s255 = sshll.u32 %s0, 4
          %s256 = int_to_ptr.vmem [resolvable:$true] %s255
          %258 = dma.vmem_to_smem %s256, 128, [#allocation3], [#allocation5]
        $region16: #{tpu_custom_call.1} parent=11 // pred_fallthru
          _
        // Predicated region
        $region17: #{tpu_custom_call.1} parent=11 // pred_check
          %p259 = pneg %p66
        $region18: #{tpu_custom_call.1} parent=11 // pred_check_branch
          %261 = sbr.rel (%p259) target = $region20
        $region19: #{tpu_custom_call.1} parent=11 // pred_region
          %s263 = ssub.s32 16, 16
          %264 = vsyncadd [#allocation7], %s263
          %s266 = sshll.u32 %s1, 4
          %s267 = int_to_ptr.vmem [resolvable:$true] %s266
          %269 = dma.vmem_to_smem %s267, 16, [#allocation6], [#allocation7]
        $region20: #{tpu_custom_call.1} parent=11 // pred_fallthru
          _
        // Predicated region
        $region21: #{tpu_custom_call.1} parent=11 // pred_check
          %p270 = pneg %p87
        $region22: #{tpu_custom_call.1} parent=11 // pred_check_branch
          %272 = sbr.rel (%p270) target = $region24
        $region23: #{tpu_custom_call.1} parent=11 // pred_region
          _
        $region24: #{tpu_custom_call.1} parent=11 // pred_fallthru
          _
        // Predicated region
        $region25: #{tpu_custom_call.1} parent=11 // pred_check
          %p273 = pneg %p186
        $region26: #{tpu_custom_call.1} parent=11 // pred_check_branch
          %275 = sbr.rel (%p273) target = $region28
        $region27: #{tpu_custom_call.1} parent=11 // pred_region
          %s277 = ssub.s32 1152, 1152
          %278 = vsyncadd [#allocation10], %s277
          %s280 = sshll.u32 [#allocation11], 4
          %s281 = int_to_ptr.vmem [resolvable:$true] %s280
          %283 = dma.hbm_to_vmem [thread:$0]  %s6, 1152, %s281, [#allocation10]
        $region28: #{tpu_custom_call.1} parent=11 // pred_fallthru
          _
        // Predicated region
        $region29: #{tpu_custom_call.1} parent=11 // pred_check
          %p284 = pneg %p207
        $region30: #{tpu_custom_call.1} parent=11 // pred_check_branch
          %286 = sbr.rel (%p284) target = $region32
        $region31: #{tpu_custom_call.1} parent=11 // pred_region
          %s288 = ssub.s32 1152, 1152
          %289 = vsyncadd [#allocation13], %s288
          %s291 = sshll.u32 [#allocation12], 4
          %s292 = int_to_ptr.vmem [resolvable:$true] %s291
          %294 = dma.hbm_to_vmem [thread:$0]  %s7, 1152, %s292, [#allocation13]
        $region32: #{tpu_custom_call.1} parent=11 // pred_fallthru
          _
      $region12: #{tpu_custom_call.1} parent=5 // pred_fallthru
        _
      %p295 = scmp.lt.s32.totalorder %s24, 3
      // Predicated region
      $region33: #{tpu_custom_call.1} parent=5 // pred_check
        %p296 = pneg %p295
      $region34: #{tpu_custom_call.1} parent=5 // pred_check_branch
        %298 = sbr.rel (%p296) target = $region36
      $region35: #{tpu_custom_call.1} parent=5 // pred_region
        // Predicated region
        $region37: #{tpu_custom_call.1} parent=35 // pred_check
          %p299 = pneg %p107
        $region38: #{tpu_custom_call.1} parent=35 // pred_check_branch
          %301 = sbr.rel (%p299) target = $region40
        $region39: #{tpu_custom_call.1} parent=35 // pred_region
          %p302 = scmp.lt.s32.totalorder %s24, 2
          %s303 = scalar_select %p302, %s24, 2
          %s304 = smul.addr %s303, 8
          %s305 = scalar_lea.vmem %s3, %s304
        $region40: #{tpu_custom_call.1} parent=35 // pred_fallthru
          _
        // Predicated region
        $region41: #{tpu_custom_call.1} parent=35 // pred_check
          %p306 = pneg %p133
        $region42: #{tpu_custom_call.1} parent=35 // pred_check_branch
          %308 = sbr.rel (%p306) target = $region44
        $region43: #{tpu_custom_call.1} parent=35 // pred_region
          %s309 = sand.u32 %s123, 1
          %s310 = scalar_lea.sflag [#allocation4], %s309
          %s311 = sand.u32 %s123, 1
          %s312 = smul.addr %s311, 72
          %s313 = scalar_lea.vmem [#allocation8], %s312
          %s315 = ssub.s32 1152, 1152
          %316 = vsyncadd %s310, %s315
          %s317 = smul.addr %s24, 9
          %s318 = smul.addr %s317, 128
          %s319 = scalar_lea.hbm %s4, %s318
          %s321 = sshll.u32 %s313, 4
          %s322 = int_to_ptr.vmem [resolvable:$true] %s321
          %324 = dma.hbm_to_vmem [thread:$0]  %s319, 1152, %s322, %s310
        $region44: #{tpu_custom_call.1} parent=35 // pred_fallthru
          _
        // Predicated region
        $region45: #{tpu_custom_call.1} parent=35 // pred_check
          %p325 = pneg %p159
        $region46: #{tpu_custom_call.1} parent=35 // pred_check_branch
          %327 = sbr.rel (%p325) target = $region48
        $region47: #{tpu_custom_call.1} parent=35 // pred_region
          %s328 = sand.u32 %s24, 1
          %s329 = scalar_lea.sflag [#allocation10], %s328
          %s330 = sand.u32 %s149, 1
          %s331 = smul.addr %s330, 72
          %s332 = scalar_lea.vmem [#allocation9], %s331
          %s334 = ssub.s32 1152, 1152
          %335 = vsyncadd %s329, %s334
          %s336 = smul.addr %s24, 9
          %s337 = smul.addr %s336, 128
          %s338 = scalar_lea.hbm %s5, %s337
          %s340 = sshll.u32 %s332, 4
          %s341 = int_to_ptr.vmem [resolvable:$true] %s340
          %343 = dma.hbm_to_vmem [thread:$0]  %s338, 1152, %s341, %s329
        $region48: #{tpu_custom_call.1} parent=35 // pred_fallthru
          _
      $region36: #{tpu_custom_call.1} parent=5 // pred_fallthru
        _
      %p344 = scmp.le.s32.totalorder 1, %s24
      %p345 = scmp.lt.s32.totalorder %s24, 4
      %p346 = pnand %p344, %p345
      %p347 = pneg %p346
      // Predicated region
      $region49: #{tpu_custom_call.1} parent=5 // pred_check
        _
      $region50: #{tpu_custom_call.1} parent=5 // pred_check_branch
        %349 = sbr.rel (%p346) target = $region52
      $region51: #{tpu_custom_call.1} parent=5 // pred_region
        %s350 = ssub.s32 %s24, 1
        // Predicated region
        $region53: #{tpu_custom_call.1} parent=51 // pred_check
          %p351 = pneg %p45
        $region54: #{tpu_custom_call.1} parent=51 // pred_check_branch
          %353 = sbr.rel (%p351) target = $region56
        $region55: #{tpu_custom_call.1} parent=51 // pred_region
          %354 = dma.done [#allocation5], 128
        $region56: #{tpu_custom_call.1} parent=51 // pred_fallthru
          _
        // Predicated region
        $region57: #{tpu_custom_call.1} parent=51 // pred_check
          %p355 = pneg %p66
        $region58: #{tpu_custom_call.1} parent=51 // pred_check_branch
          %357 = sbr.rel (%p355) target = $region60
        $region59: #{tpu_custom_call.1} parent=51 // pred_region
          %358 = dma.done [#allocation7], 16
        $region60: #{tpu_custom_call.1} parent=51 // pred_fallthru
          _
        %s359 = sand.u32 %s126, 1
        %s360 = scalar_lea.sflag [#allocation4], %s359
        %s361 = sand.u32 %s126, 1
        %s362 = smul.addr %s361, 72
        %s363 = scalar_lea.vmem [#allocation8], %s362
        // Predicated region
        $region61: #{tpu_custom_call.1} parent=51 // pred_check
          %p364 = pneg %p139
        $region62: #{tpu_custom_call.1} parent=51 // pred_check_branch
          %366 = sbr.rel (%p364) target = $region64
        $region63: #{tpu_custom_call.1} parent=51 // pred_region
          %367 = dma.done %s360, 1152
        $region64: #{tpu_custom_call.1} parent=51 // pred_fallthru
          _
        %s368 = sand.u32 %s29, 1
        %s369 = scalar_lea.sflag [#allocation10], %s368
        %s370 = sand.u32 %s152, 1
        %s371 = smul.addr %s370, 72
        %s372 = scalar_lea.vmem [#allocation9], %s371
        // Predicated region
        $region65: #{tpu_custom_call.1} parent=51 // pred_check
          %p373 = pneg %p165
        $region66: #{tpu_custom_call.1} parent=51 // pred_check_branch
          %375 = sbr.rel (%p373) target = $region68
        $region67: #{tpu_custom_call.1} parent=51 // pred_region
          %376 = dma.done %s369, 1152
        $region68: #{tpu_custom_call.1} parent=51 // pred_fallthru
          _
        // Predicated region
        $region69: #{tpu_custom_call.1} parent=51 // pred_check
          %p377 = pneg %p186
        $region70: #{tpu_custom_call.1} parent=51 // pred_check_branch
          %379 = sbr.rel (%p377) target = $region72
        $region71: #{tpu_custom_call.1} parent=51 // pred_region
          %380 = dma.done [#allocation10], 1152
        $region72: #{tpu_custom_call.1} parent=51 // pred_fallthru
          _
        // Predicated region
        $region73: #{tpu_custom_call.1} parent=51 // pred_check
          %p381 = pneg %p207
        $region74: #{tpu_custom_call.1} parent=51 // pred_check_branch
          %383 = sbr.rel (%p381) target = $region76
        $region75: #{tpu_custom_call.1} parent=51 // pred_region
          %384 = dma.done [#allocation13], 1152
        $region76: #{tpu_custom_call.1} parent=51 // pred_fallthru
          _
        %385 = sfence
        %p386 = pneg %p45
        %p387 = pneg %p42
        %p388 = pneg %p66
        %p389 = pneg %p63
        %p390 = pneg %p87
        %p391 = pneg %p84
        %p392 = scmp.lt.s32.totalorder %s29, 2
        %s393 = scalar_select %p392, %s29, 2
        %s394 = smul.addr %s393, 8
        %s395 = scalar_lea.vmem %s3, %s394
        %p396 = pneg %p113
        %p397 = pneg %p110
        %s398 = sand.u32 %s126, 1
        %s399 = scalar_lea.sflag [#allocation4], %s398
        %s400 = sand.u32 %s126, 1
        %s401 = smul.addr %s400, 72
        %s402 = scalar_lea.vmem [#allocation8], %s401
        %p403 = pneg %p139
        %p404 = pneg %p136
        %s405 = sand.u32 %s29, 1
        %s406 = scalar_lea.sflag [#allocation10], %s405
        %s407 = sand.u32 %s152, 1
        %s408 = smul.addr %s407, 72
        %s409 = scalar_lea.vmem [#allocation9], %s408
        %p410 = pneg %p165
        %p411 = pneg %p162
        %p412 = pneg %p186
        %p413 = pneg %p183
        %p414 = pneg %p207
        %p415 = pneg %p204
        %p416 = pneg %p233
        %p417 = pneg %p230
        %p418 = scmp.lt.s32.totalorder %s29, 2
        %s419 = scalar_select %p418, %s29, 2
        %s420 = smul.addr %s419, 8
        %s421 = scalar_lea.vmem %s8, %s420
        %p422 = scmp.lt.s32.totalorder %s29, 2
        %s423 = scalar_select %p422, %s29, 2
        %s424 = smul.addr %s423, 8
        %s425 = scalar_lea.vmem %s3, %s424
        %p426 = scmp.lt.s32.totalorder %s29, 2
        %s427 = scalar_select %p426, %s29, 2
        %s428 = smul.addr %s427, 8
        %s429 = scalar_lea.vmem %s8, %s428
        %v430 = vld [vmem:[#allocation11] sm:$0xff]
        %v431 = vld [vmem:[#allocation11 + $0x8] sm:$0xff]
        %v432 = vld [vmem:[#allocation11 + $0x10] sm:$0xff]
        %v433 = vld [vmem:[#allocation11 + $0x18] sm:$0xff]
        %v434 = vld [vmem:[#allocation11 + $0x20] sm:$0xff]
        %v435 = vld [vmem:[#allocation11 + $0x28] sm:$0xff]
        %v436 = vld [vmem:[#allocation11 + $0x30] sm:$0xff]
        %v437 = vld [vmem:[#allocation11 + $0x38] sm:$0xff]
        %v438 = vld [vmem:[#allocation11 + $0x40] sm:$0xff]
        %v439 = vld [vmem:[%s425] sm:$0xff]
        %v440 = vlaneseq
        %v441 = vand.u32 %v440, 127
        %442 = vset.pattern.permute.xlu0 0
        %443 = vperm.xlu0 %442, %v439
        %v444 = vpop.permute.xlu0 %443
        %vm445 = vcmp.eq.s32.totalorder %v444, %v441
        %v446 = vsel %vm445, 1, 0
        %v447 = vcvt.s32.f32 %v446
        %vm448 = vcmask 64512
        %v450 = vsel %vm448, %v447, 0
        %452 = vmatprep.subr.mxu0 %v431
        %453 = vmatpush1.msra.mxu0 %v430
        %454 = vmatprep.subr.mxu0 0.0
        %455 = vmatpush1.msra.mxu0 0.0
        %456 = vmatprep.subr.mxu0 0.0
        %457 = vmatpush1.msra.mxu0 0.0
        %458 = vmatprep.subr.mxu0 0.0
        %459 = vmatpush1.msra.mxu0 0.0
        %460 = vmatprep.subr.mxu0 0.0
        %461 = vmatpush1.msra.mxu0 0.0
        %462 = vmatprep.subr.mxu0 0.0
        %463 = vmatpush1.msra.mxu0 0.0
        %464 = vmatprep.subr.mxu0 0.0
        %465 = vmatpush1.msra.mxu0 0.0
        %466 = vmatprep.subr.mxu0 0.0
        %467 = vmatpush1.msra.mxu0 0.0
        %468 = vmatprep.subr.mxu0 0.0
        %469 = vmatpush1.msra.mxu0 0.0
        %470 = vmatprep.subr.mxu0 0.0
        %471 = vmatpush1.msra.mxu0 0.0
        %472 = vmatprep.subr.mxu0 0.0
        %473 = vmatpush1.msra.mxu0 0.0
        %474 = vmatprep.subr.mxu0 0.0
        %475 = vmatpush1.msra.mxu0 0.0
        %476 = vmatprep.subr.mxu0 0.0
        %477 = vmatpush1.msra.mxu0 0.0
        %478 = vmatprep.subr.mxu0 0.0
        %479 = vmatpush1.msra.mxu0 0.0
        %480 = vmatprep.subr.mxu0 0.0
        %481 = vmatpush1.msra.mxu0 0.0
        %482 = vmatprep.subr.mxu0 0.0
        %483 = vmatpush1.msra.mxu0 0.0
        %484 = vmatprep.subr.mxu0 0.0
        %485 = vmatpush1.msra.mxu0 0.0
        %486 = vmatprep.subr.mxu0 0.0
        %487 = vmatpush1.msra.mxu0 0.0
        %488 = vmatprep.subr.mxu0 0.0
        %489 = vmatpush1.msra.mxu0 0.0
        %490 = vmatprep.subr.mxu0 0.0
        %491 = vmatpush1.msra.mxu0 0.0
        %492 = vmatprep.subr.mxu0 0.0
        %493 = vmatpush1.msra.mxu0 0.0
        %494 = vmatprep.subr.mxu0 0.0
        %495 = vmatpush1.msra.mxu0 0.0
        %496 = vmatprep.subr.mxu0 0.0
        %497 = vmatpush1.msra.mxu0 0.0
        %498 = vmatprep.subr.mxu0 0.0
        %499 = vmatpush1.msra.mxu0 0.0
        %500 = vmatprep.subr.mxu0 0.0
        %501 = vmatpush1.msra.mxu0 0.0
        %502 = vmatprep.subr.mxu0 0.0
        %503 = vmatpush1.msra.mxu0 0.0
        %504 = vmatprep.subr.mxu0 0.0
        %505 = vmatpush1.msra.mxu0 0.0
        %506 = vmatprep.subr.mxu0 0.0
        %507 = vmatpush1.msra.mxu0 0.0
        %508 = vmatprep.subr.mxu0 0.0
        %509 = vmatpush1.msra.mxu0 0.0
        %510 = vmatprep.subr.mxu0 0.0
        %511 = vmatpush1.msra.mxu0 0.0
        %512 = vmatprep.subr.mxu0 0.0
        %513 = vmatpush1.msra.mxu0 0.0
        %514 = vmatprep.subr.mxu0 0.0
        %515 = vmatpush1.msra.mxu0 0.0
        %516 = vmatprep.mubr.f32.mxu0 0.0
        %517 = vmatmul.mubr.f32.gmra.mrb[0].mxu0 %v450
        %v518 = vpop.f32.mrb[0].mxu0
        %v519 = vadd.f32 0.0, %v518
        %v520 = vpop.f32.mrb[0].mxu0
        %v521 = vadd.f32 0.0, %v520
        %522 = vdwg.mxu0
        %523 = vmatprep.subr.mxu0 %v433
        %524 = vmatpush1.msra.mxu0 %v432
        %525 = vmatprep.subr.mxu0 0.0
        %526 = vmatpush1.msra.mxu0 0.0
        %527 = vmatprep.subr.mxu0 0.0
        %528 = vmatpush1.msra.mxu0 0.0
        %529 = vmatprep.subr.mxu0 0.0
        %530 = vmatpush1.msra.mxu0 0.0
        %531 = vmatprep.subr.mxu0 0.0
        %532 = vmatpush1.msra.mxu0 0.0
        %533 = vmatprep.subr.mxu0 0.0
        %534 = vmatpush1.msra.mxu0 0.0
        %535 = vmatprep.subr.mxu0 0.0
        %536 = vmatpush1.msra.mxu0 0.0
        %537 = vmatprep.subr.mxu0 0.0
        %538 = vmatpush1.msra.mxu0 0.0
        %539 = vmatprep.subr.mxu0 0.0
        %540 = vmatpush1.msra.mxu0 0.0
        %541 = vmatprep.subr.mxu0 0.0
        %542 = vmatpush1.msra.mxu0 0.0
        %543 = vmatprep.subr.mxu0 0.0
        %544 = vmatpush1.msra.mxu0 0.0
        %545 = vmatprep.subr.mxu0 0.0
        %546 = vmatpush1.msra.mxu0 0.0
        %547 = vmatprep.subr.mxu0 0.0
        %548 = vmatpush1.msra.mxu0 0.0
        %549 = vmatprep.subr.mxu0 0.0
        %550 = vmatpush1.msra.mxu0 0.0
        %551 = vmatprep.subr.mxu0 0.0
        %552 = vmatpush1.msra.mxu0 0.0
        %553 = vmatprep.subr.mxu0 0.0
        %554 = vmatpush1.msra.mxu0 0.0
        %555 = vmatprep.subr.mxu0 0.0
        %556 = vmatpush1.msra.mxu0 0.0
        %557 = vmatprep.subr.mxu0 0.0
        %558 = vmatpush1.msra.mxu0 0.0
        %559 = vmatprep.subr.mxu0 0.0
        %560 = vmatpush1.msra.mxu0 0.0
        %561 = vmatprep.subr.mxu0 0.0
        %562 = vmatpush1.msra.mxu0 0.0
        %563 = vmatprep.subr.mxu0 0.0
        %564 = vmatpush1.msra.mxu0 0.0
        %565 = vmatprep.subr.mxu0 0.0
        %566 = vmatpush1.msra.mxu0 0.0
        %567 = vmatprep.subr.mxu0 0.0
        %568 = vmatpush1.msra.mxu0 0.0
        %569 = vmatprep.subr.mxu0 0.0
        %570 = vmatpush1.msra.mxu0 0.0
        %571 = vmatprep.subr.mxu0 0.0
        %572 = vmatpush1.msra.mxu0 0.0
        %573 = vmatprep.subr.mxu0 0.0
        %574 = vmatpush1.msra.mxu0 0.0
        %575 = vmatprep.subr.mxu0 0.0
        %576 = vmatpush1.msra.mxu0 0.0
        %577 = vmatprep.subr.mxu0 0.0
        %578 = vmatpush1.msra.mxu0 0.0
        %579 = vmatprep.subr.mxu0 0.0
        %580 = vmatpush1.msra.mxu0 0.0
        %581 = vmatprep.subr.mxu0 0.0
        %582 = vmatpush1.msra.mxu0 0.0
        %583 = vmatprep.subr.mxu0 0.0
        %584 = vmatpush1.msra.mxu0 0.0
        %585 = vmatprep.subr.mxu0 0.0
        %586 = vmatpush1.msra.mxu0 0.0
        %587 = vmatprep.mubr.f32.mxu0 0.0
        %588 = vmatmul.mubr.f32.gmra.mrb[0].mxu0 %v450
        %v589 = vpop.f32.mrb[0].mxu0
        %v590 = vadd.f32 0.0, %v589
        %v591 = vpop.f32.mrb[0].mxu0
        %v592 = vadd.f32 0.0, %v591
        %593 = vdwg.mxu0
        %594 = vmatprep.subr.mxu0 %v435
        %595 = vmatpush1.msra.mxu0 %v434
        %596 = vmatprep.subr.mxu0 0.0
        %597 = vmatpush1.msra.mxu0 0.0
        %598 = vmatprep.subr.mxu0 0.0
        %599 = vmatpush1.msra.mxu0 0.0
        %600 = vmatprep.subr.mxu0 0.0
        %601 = vmatpush1.msra.mxu0 0.0
        %602 = vmatprep.subr.mxu0 0.0
        %603 = vmatpush1.msra.mxu0 0.0
        %604 = vmatprep.subr.mxu0 0.0
        %605 = vmatpush1.msra.mxu0 0.0
        %606 = vmatprep.subr.mxu0 0.0
        %607 = vmatpush1.msra.mxu0 0.0
        %608 = vmatprep.subr.mxu0 0.0
        %609 = vmatpush1.msra.mxu0 0.0
        %610 = vmatprep.subr.mxu0 0.0
        %611 = vmatpush1.msra.mxu0 0.0
        %612 = vmatprep.subr.mxu0 0.0
        %613 = vmatpush1.msra.mxu0 0.0
        %614 = vmatprep.subr.mxu0 0.0
        %615 = vmatpush1.msra.mxu0 0.0
        %616 = vmatprep.subr.mxu0 0.0
        %617 = vmatpush1.msra.mxu0 0.0
        %618 = vmatprep.subr.mxu0 0.0
        %619 = vmatpush1.msra.mxu0 0.0
        %620 = vmatprep.subr.mxu0 0.0
        %621 = vmatpush1.msra.mxu0 0.0
        %622 = vmatprep.subr.mxu0 0.0
        %623 = vmatpush1.msra.mxu0 0.0
        %624 = vmatprep.subr.mxu0 0.0
        %625 = vmatpush1.msra.mxu0 0.0
        %626 = vmatprep.subr.mxu0 0.0
        %627 = vmatpush1.msra.mxu0 0.0
        %628 = vmatprep.subr.mxu0 0.0
        %629 = vmatpush1.msra.mxu0 0.0
        %630 = vmatprep.subr.mxu0 0.0
        %631 = vmatpush1.msra.mxu0 0.0
        %632 = vmatprep.subr.mxu0 0.0
        %633 = vmatpush1.msra.mxu0 0.0
        %634 = vmatprep.subr.mxu0 0.0
        %635 = vmatpush1.msra.mxu0 0.0
        %636 = vmatprep.subr.mxu0 0.0
        %637 = vmatpush1.msra.mxu0 0.0
        %638 = vmatprep.subr.mxu0 0.0
        %639 = vmatpush1.msra.mxu0 0.0
        %640 = vmatprep.subr.mxu0 0.0
        %641 = vmatpush1.msra.mxu0 0.0
        %642 = vmatprep.subr.mxu0 0.0
        %643 = vmatpush1.msra.mxu0 0.0
        %644 = vmatprep.subr.mxu0 0.0
        %645 = vmatpush1.msra.mxu0 0.0
        %646 = vmatprep.subr.mxu0 0.0
        %647 = vmatpush1.msra.mxu0 0.0
        %648 = vmatprep.subr.mxu0 0.0
        %649 = vmatpush1.msra.mxu0 0.0
        %650 = vmatprep.subr.mxu0 0.0
        %651 = vmatpush1.msra.mxu0 0.0
        %652 = vmatprep.subr.mxu0 0.0
        %653 = vmatpush1.msra.mxu0 0.0
        %654 = vmatprep.subr.mxu0 0.0
        %655 = vmatpush1.msra.mxu0 0.0
        %656 = vmatprep.subr.mxu0 0.0
        %657 = vmatpush1.msra.mxu0 0.0
        %658 = vmatprep.mubr.f32.mxu0 0.0
        %659 = vmatmul.mubr.f32.gmra.mrb[0].mxu0 %v450
        %v660 = vpop.f32.mrb[0].mxu0
        %v661 = vadd.f32 0.0, %v660
        %v662 = vpop.f32.mrb[0].mxu0
        %v663 = vadd.f32 0.0, %v662
        %664 = vdwg.mxu0
        %665 = vmatprep.subr.mxu0 %v437
        %666 = vmatpush1.msra.mxu0 %v436
        %667 = vmatprep.subr.mxu0 0.0
        %668 = vmatpush1.msra.mxu0 0.0
        %669 = vmatprep.subr.mxu0 0.0
        %670 = vmatpush1.msra.mxu0 0.0
        %671 = vmatprep.subr.mxu0 0.0
        %672 = vmatpush1.msra.mxu0 0.0
        %673 = vmatprep.subr.mxu0 0.0
        %674 = vmatpush1.msra.mxu0 0.0
        %675 = vmatprep.subr.mxu0 0.0
        %676 = vmatpush1.msra.mxu0 0.0
        %677 = vmatprep.subr.mxu0 0.0
        %678 = vmatpush1.msra.mxu0 0.0
        %679 = vmatprep.subr.mxu0 0.0
        %680 = vmatpush1.msra.mxu0 0.0
        %681 = vmatprep.subr.mxu0 0.0
        %682 = vmatpush1.msra.mxu0 0.0
        %683 = vmatprep.subr.mxu0 0.0
        %684 = vmatpush1.msra.mxu0 0.0
        %685 = vmatprep.subr.mxu0 0.0
        %686 = vmatpush1.msra.mxu0 0.0
        %687 = vmatprep.subr.mxu0 0.0
        %688 = vmatpush1.msra.mxu0 0.0
        %689 = vmatprep.subr.mxu0 0.0
        %690 = vmatpush1.msra.mxu0 0.0
        %691 = vmatprep.subr.mxu0 0.0
        %692 = vmatpush1.msra.mxu0 0.0
        %693 = vmatprep.subr.mxu0 0.0
        %694 = vmatpush1.msra.mxu0 0.0
        %695 = vmatprep.subr.mxu0 0.0
        %696 = vmatpush1.msra.mxu0 0.0
        %697 = vmatprep.subr.mxu0 0.0
        %698 = vmatpush1.msra.mxu0 0.0
        %699 = vmatprep.subr.mxu0 0.0
        %700 = vmatpush1.msra.mxu0 0.0
        %701 = vmatprep.subr.mxu0 0.0
        %702 = vmatpush1.msra.mxu0 0.0
        %703 = vmatprep.subr.mxu0 0.0
        %704 = vmatpush1.msra.mxu0 0.0
        %705 = vmatprep.subr.mxu0 0.0
        %706 = vmatpush1.msra.mxu0 0.0
        %707 = vmatprep.subr.mxu0 0.0
        %708 = vmatpush1.msra.mxu0 0.0
        %709 = vmatprep.subr.mxu0 0.0
        %710 = vmatpush1.msra.mxu0 0.0
        %711 = vmatprep.subr.mxu0 0.0
        %712 = vmatpush1.msra.mxu0 0.0
        %713 = vmatprep.subr.mxu0 0.0
        %714 = vmatpush1.msra.mxu0 0.0
        %715 = vmatprep.subr.mxu0 0.0
        %716 = vmatpush1.msra.mxu0 0.0
        %717 = vmatprep.subr.mxu0 0.0
        %718 = vmatpush1.msra.mxu0 0.0
        %719 = vmatprep.subr.mxu0 0.0
        %720 = vmatpush1.msra.mxu0 0.0
        %721 = vmatprep.subr.mxu0 0.0
        %722 = vmatpush1.msra.mxu0 0.0
        %723 = vmatprep.subr.mxu0 0.0
        %724 = vmatpush1.msra.mxu0 0.0
        %725 = vmatprep.subr.mxu0 0.0
        %726 = vmatpush1.msra.mxu0 0.0
        %727 = vmatprep.subr.mxu0 0.0
        %728 = vmatpush1.msra.mxu0 0.0
        %729 = vmatprep.mubr.f32.mxu0 0.0
        %730 = vmatmul.mubr.f32.gmra.mrb[0].mxu0 %v450
        %v731 = vpop.f32.mrb[0].mxu0
        %v732 = vadd.f32 0.0, %v731
        %v733 = vpop.f32.mrb[0].mxu0
        %v734 = vadd.f32 0.0, %v733
        %735 = vdwg.mxu0
        %736 = vmatprep.subr.mxu0 0.0
        %737 = vmatpush1.msra.mxu0 %v438
        %738 = vmatprep.subr.mxu0 0.0
        %739 = vmatpush1.msra.mxu0 0.0
        %740 = vmatprep.subr.mxu0 0.0
        %741 = vmatpush1.msra.mxu0 0.0
        %742 = vmatprep.subr.mxu0 0.0
        %743 = vmatpush1.msra.mxu0 0.0
        %744 = vmatprep.subr.mxu0 0.0
        %745 = vmatpush1.msra.mxu0 0.0
        %746 = vmatprep.subr.mxu0 0.0
        %747 = vmatpush1.msra.mxu0 0.0
        %748 = vmatprep.subr.mxu0 0.0
        %749 = vmatpush1.msra.mxu0 0.0
        %750 = vmatprep.subr.mxu0 0.0
        %751 = vmatpush1.msra.mxu0 0.0
        %752 = vmatprep.subr.mxu0 0.0
        %753 = vmatpush1.msra.mxu0 0.0
        %754 = vmatprep.subr.mxu0 0.0
        %755 = vmatpush1.msra.mxu0 0.0
        %756 = vmatprep.subr.mxu0 0.0
        %757 = vmatpush1.msra.mxu0 0.0
        %758 = vmatprep.subr.mxu0 0.0
        %759 = vmatpush1.msra.mxu0 0.0
        %760 = vmatprep.subr.mxu0 0.0
        %761 = vmatpush1.msra.mxu0 0.0
        %762 = vmatprep.subr.mxu0 0.0
        %763 = vmatpush1.msra.mxu0 0.0
        %764 = vmatprep.subr.mxu0 0.0
        %765 = vmatpush1.msra.mxu0 0.0
        %766 = vmatprep.subr.mxu0 0.0
        %767 = vmatpush1.msra.mxu0 0.0
        %768 = vmatprep.subr.mxu0 0.0
        %769 = vmatpush1.msra.mxu0 0.0
        %770 = vmatprep.subr.mxu0 0.0
        %771 = vmatpush1.msra.mxu0 0.0
        %772 = vmatprep.subr.mxu0 0.0
        %773 = vmatpush1.msra.mxu0 0.0
        %774 = vmatprep.subr.mxu0 0.0
        %775 = vmatpush1.msra.mxu0 0.0
        %776 = vmatprep.subr.mxu0 0.0
        %777 = vmatpush1.msra.mxu0 0.0
        %778 = vmatprep.subr.mxu0 0.0
        %779 = vmatpush1.msra.mxu0 0.0
        %780 = vmatprep.subr.mxu0 0.0
        %781 = vmatpush1.msra.mxu0 0.0
        %782 = vmatprep.subr.mxu0 0.0
        %783 = vmatpush1.msra.mxu0 0.0
        %784 = vmatprep.subr.mxu0 0.0
        %785 = vmatpush1.msra.mxu0 0.0
        %786 = vmatprep.subr.mxu0 0.0
        %787 = vmatpush1.msra.mxu0 0.0
        %788 = vmatprep.subr.mxu0 0.0
        %789 = vmatpush1.msra.mxu0 0.0
        %790 = vmatprep.subr.mxu0 0.0
        %791 = vmatpush1.msra.mxu0 0.0
        %792 = vmatprep.subr.mxu0 0.0
        %793 = vmatpush1.msra.mxu0 0.0
        %794 = vmatprep.subr.mxu0 0.0
        %795 = vmatpush1.msra.mxu0 0.0
        %796 = vmatprep.subr.mxu0 0.0
        %797 = vmatpush1.msra.mxu0 0.0
        %798 = vmatprep.subr.mxu0 0.0
        %799 = vmatpush1.msra.mxu0 0.0
        %800 = vmatprep.mubr.f32.mxu0 0.0
        %801 = vmatmul.mubr.f32.gmra.mrb[0].mxu0 %v450
        %v802 = vpop.f32.mrb[0].mxu0
        %v803 = vadd.f32 0.0, %v802
        %v804 = vpop.f32.mrb[0].mxu0
        %805 = vdwg.mxu0
        %v806 = vld [vmem:[%s363] sm:$0xff]
        %v807 = vld [vmem:[%s363 + $0x8] sm:$0xff]
        %v808 = vld [vmem:[%s363 + $0x10] sm:$0xff]
        %v809 = vld [vmem:[%s363 + $0x18] sm:$0xff]
        %v810 = vld [vmem:[%s363 + $0x20] sm:$0xff]
        %v811 = vld [vmem:[%s363 + $0x28] sm:$0xff]
        %v812 = vld [vmem:[%s363 + $0x30] sm:$0xff]
        %v813 = vld [vmem:[%s363 + $0x38] sm:$0xff]
        %v814 = vld [vmem:[%s363 + $0x40] sm:$0xff]
        %v815 = vld [vmem:[%s372] sm:$0xff]
        %v816 = vld [vmem:[%s372 + $0x8] sm:$0xff]
        %v817 = vld [vmem:[%s372 + $0x10] sm:$0xff]
        %v818 = vld [vmem:[%s372 + $0x18] sm:$0xff]
        %v819 = vld [vmem:[%s372 + $0x20] sm:$0xff]
        %v820 = vld [vmem:[%s372 + $0x28] sm:$0xff]
        %v821 = vld [vmem:[%s372 + $0x30] sm:$0xff]
        %v822 = vld [vmem:[%s372 + $0x38] sm:$0xff]
        %v823 = vld [vmem:[%s372 + $0x40] sm:$0xff]
        %s824 = sld [smem:[#allocation3]]
        %s825 = sld [smem:[#allocation3 + $0x1]]
        %s826 = sld [smem:[#allocation3 + $0x2]]
        %s827 = sld [smem:[#allocation6]]
        %v828 = vstv %s824
        %v829 = vmul.f32 %v806, %v828
        %v830 = vmul.f32 %v807, %v828
        %v831 = vmul.f32 %v808, %v828
        %v832 = vmul.f32 %v809, %v828
        %v833 = vmul.f32 %v810, %v828
        %v834 = vmul.f32 %v811, %v828
        %v835 = vmul.f32 %v812, %v828
        %v836 = vmul.f32 %v813, %v828
        %v837 = vmul.f32 %v814, %v828
        %v838 = vstv %s825
        %v839 = vmul.f32 %v519, %v838
        %v840 = vmul.f32 %v521, %v838
        %v841 = vmul.f32 %v590, %v838
        %v842 = vmul.f32 %v592, %v838
        %v843 = vmul.f32 %v661, %v838
        %v844 = vmul.f32 %v663, %v838
        %v845 = vmul.f32 %v732, %v838
        %v846 = vmul.f32 %v734, %v838
        %v847 = vmul.f32 %v803, %v838
        %v848 = vadd.f32 %v829, %v839
        %v849 = vadd.f32 %v830, %v840
        %v850 = vadd.f32 %v831, %v841
        %v851 = vadd.f32 %v832, %v842
        %v852 = vadd.f32 %v833, %v843
        %v853 = vadd.f32 %v834, %v844
        %v854 = vadd.f32 %v835, %v845
        %v855 = vadd.f32 %v836, %v846
        %v856 = vadd.f32 %v837, %v847
        %v857 = vstv %s826
        %v858 = vmul.f32 %v815, %v857
        %v859 = vmul.f32 %v816, %v857
        %v860 = vmul.f32 %v817, %v857
        %v861 = vmul.f32 %v818, %v857
        %v862 = vmul.f32 %v819, %v857
        %v863 = vmul.f32 %v820, %v857
        %v864 = vmul.f32 %v821, %v857
        %v865 = vmul.f32 %v822, %v857
        %v866 = vmul.f32 %v823, %v857
        %v867 = vadd.f32 %v848, %v858
        %v868 = vadd.f32 %v849, %v859
        %v869 = vadd.f32 %v850, %v860
        %v870 = vadd.f32 %v851, %v861
        %v871 = vadd.f32 %v852, %v862
        %v872 = vadd.f32 %v853, %v863
        %v873 = vadd.f32 %v854, %v864
        %v874 = vadd.f32 %v855, %v865
        %v875 = vadd.f32 %v856, %v866
        %v876 = vstv %s827
        %v877 = vadd.f32 %v867, %v876
        %v878 = vadd.f32 %v868, %v876
        %v879 = vadd.f32 %v869, %v876
        %v880 = vadd.f32 %v870, %v876
        %v881 = vadd.f32 %v871, %v876
        %v882 = vadd.f32 %v872, %v876
        %v883 = vadd.f32 %v873, %v876
        %v884 = vadd.f32 %v874, %v876
        %v885 = vadd.f32 %v875, %v876
        %v886 = vmax.f32 %v877, 0.0
        %v887 = vmax.f32 %v878, 0.0
        %v888 = vmax.f32 %v879, 0.0
        %v889 = vmax.f32 %v880, 0.0
        %v890 = vmax.f32 %v881, 0.0
        %v891 = vmax.f32 %v882, 0.0
        %v892 = vmax.f32 %v883, 0.0
        %v893 = vmax.f32 %v884, 0.0
        %v894 = vmax.f32 %v885, 0.0
        %v895 = vld [vmem:[#allocation12] ss:$8 sm:$0xf]
        %v896 = vld [vmem:[#allocation12] ss:$8 sm:$0xf0]
        %v897 = vor.u32 %v895, %v896
        %s898 = scalar_lea.vmem [#allocation12], 64
        %v899 = vld [vmem:[%s898] ss:$8 sm:$0x1]
        %v902 = vlaneseq
        %v903 = vshrl.u32 %v902, 7
        %v904 = vsub.s32 0, %v903
        %v905 = vrot.slane %v897, %v904
        %v906 = vlaneseq
        %v907 = vshrl.u32 %v906, 7
        %v908 = vsub.s32 1, %v907
        %v909 = vrot.slane %v897, %v908
        %v910 = vlaneseq
        %v911 = vshrl.u32 %v910, 7
        %v912 = vsub.s32 2, %v911
        %v913 = vrot.slane %v897, %v912
        %v914 = vlaneseq
        %v915 = vshrl.u32 %v914, 7
        %v916 = vsub.s32 3, %v915
        %v917 = vrot.slane %v897, %v916
        %v918 = vlaneseq
        %v919 = vshrl.u32 %v918, 7
        %v920 = vsub.s32 4, %v919
        %v921 = vrot.slane %v897, %v920
        %v922 = vlaneseq
        %v923 = vshrl.u32 %v922, 7
        %v924 = vsub.s32 5, %v923
        %v925 = vrot.slane %v897, %v924
        %v926 = vlaneseq
        %v927 = vshrl.u32 %v926, 7
        %v928 = vsub.s32 6, %v927
        %v929 = vrot.slane %v897, %v928
        %v930 = vlaneseq
        %v931 = vshrl.u32 %v930, 7
        %v932 = vsub.s32 7, %v931
        %v933 = vrot.slane %v897, %v932
        %v934 = vlaneseq
        %v935 = vshrl.u32 %v934, 7
        %v936 = vsub.s32 0, %v935
        %v937 = vrot.slane %v899, %v936
        %v947 = vmul.f32 %v886, %v905
        %v948 = vmul.f32 %v887, %v909
        %v949 = vmul.f32 %v888, %v913
        %v950 = vmul.f32 %v889, %v917
        %v951 = vmul.f32 %v890, %v921
        %v952 = vmul.f32 %v891, %v925
        %v953 = vmul.f32 %v892, %v929
        %v954 = vmul.f32 %v893, %v933
        %v955 = vmul.f32 %v894, %v937
        %v956 = vadd.f32 %v947, 0.0
        %v957 = vadd.f32 %v948, 0.0
        %v958 = vadd.f32 %v949, 0.0
        %v959 = vadd.f32 %v950, 0.0
        %v960 = vadd.f32 %v951, 0.0
        %v961 = vadd.f32 %v952, 0.0
        %v962 = vadd.f32 %v953, 0.0
        %v963 = vadd.f32 %v954, 0.0
        %v964 = vadd.f32 %v955, 0.0
        %s965 = sld [smem:[#allocation3 + $0x80]]
        %s966 = sld [smem:[#allocation3 + $0x81]]
        %s967 = sld [smem:[#allocation3 + $0x82]]
        %s968 = sld [smem:[#allocation6 + $0x1]]
        %v969 = vstv %s965
        %v970 = vmul.f32 %v806, %v969
        %v971 = vmul.f32 %v807, %v969
        %v972 = vmul.f32 %v808, %v969
        %v973 = vmul.f32 %v809, %v969
        %v974 = vmul.f32 %v810, %v969
        %v975 = vmul.f32 %v811, %v969
        %v976 = vmul.f32 %v812, %v969
        %v977 = vmul.f32 %v813, %v969
        %v978 = vmul.f32 %v814, %v969
        %v979 = vstv %s966
        %v980 = vmul.f32 %v519, %v979
        %v981 = vmul.f32 %v521, %v979
        %v982 = vmul.f32 %v590, %v979
        %v983 = vmul.f32 %v592, %v979
        %v984 = vmul.f32 %v661, %v979
        %v985 = vmul.f32 %v663, %v979
        %v986 = vmul.f32 %v732, %v979
        %v987 = vmul.f32 %v734, %v979
        %v988 = vmul.f32 %v803, %v979
        %v989 = vadd.f32 %v970, %v980
        %v990 = vadd.f32 %v971, %v981
        %v991 = vadd.f32 %v972, %v982
        %v992 = vadd.f32 %v973, %v983
        %v993 = vadd.f32 %v974, %v984
        %v994 = vadd.f32 %v975, %v985
        %v995 = vadd.f32 %v976, %v986
        %v996 = vadd.f32 %v977, %v987
        %v997 = vadd.f32 %v978, %v988
        %v998 = vstv %s967
        %v999 = vmul.f32 %v815, %v998
        %v1000 = vmul.f32 %v816, %v998
        %v1001 = vmul.f32 %v817, %v998
        %v1002 = vmul.f32 %v818, %v998
        %v1003 = vmul.f32 %v819, %v998
        %v1004 = vmul.f32 %v820, %v998
        %v1005 = vmul.f32 %v821, %v998
        %v1006 = vmul.f32 %v822, %v998
        %v1007 = vmul.f32 %v823, %v998
        %v1008 = vadd.f32 %v989, %v999
        %v1009 = vadd.f32 %v990, %v1000
        %v1010 = vadd.f32 %v991, %v1001
        %v1011 = vadd.f32 %v992, %v1002
        %v1012 = vadd.f32 %v993, %v1003
        %v1013 = vadd.f32 %v994, %v1004
        %v1014 = vadd.f32 %v995, %v1005
        %v1015 = vadd.f32 %v996, %v1006
        %v1016 = vadd.f32 %v997, %v1007
        %v1017 = vstv %s968
        %v1018 = vadd.f32 %v1008, %v1017
        %v1019 = vadd.f32 %v1009, %v1017
        %v1020 = vadd.f32 %v1010, %v1017
        %v1021 = vadd.f32 %v1011, %v1017
        %v1022 = vadd.f32 %v1012, %v1017
        %v1023 = vadd.f32 %v1013, %v1017
        %v1024 = vadd.f32 %v1014, %v1017
        %v1025 = vadd.f32 %v1015, %v1017
        %v1026 = vadd.f32 %v1016, %v1017
        %v1027 = vmax.f32 %v1018, 0.0
        %v1028 = vmax.f32 %v1019, 0.0
        %v1029 = vmax.f32 %v1020, 0.0
        %v1030 = vmax.f32 %v1021, 0.0
        %v1031 = vmax.f32 %v1022, 0.0
        %v1032 = vmax.f32 %v1023, 0.0
        %v1033 = vmax.f32 %v1024, 0.0
        %v1034 = vmax.f32 %v1025, 0.0
        %v1035 = vmax.f32 %v1026, 0.0
        %s1036 = scalar_lea.vmem [#allocation12], 1
        %v1037 = vld [vmem:[%s1036] ss:$8 sm:$0xf]
        %v1038 = vld [vmem:[%s1036] ss:$8 sm:$0xf0]
        %v1039 = vor.u32 %v1037, %v1038
        %s1040 = scalar_lea.vmem [#allocation12], 65
        %v1041 = vld [vmem:[%s1040] ss:$8 sm:$0x1]
        %v1044 = vlaneseq
        %v1045 = vshrl.u32 %v1044, 7
        %v1046 = vsub.s32 0, %v1045
        %v1047 = vrot.slane %v1039, %v1046
        %v1048 = vlaneseq
        %v1049 = vshrl.u32 %v1048, 7
        %v1050 = vsub.s32 1, %v1049
        %v1051 = vrot.slane %v1039, %v1050
        %v1052 = vlaneseq
        %v1053 = vshrl.u32 %v1052, 7
        %v1054 = vsub.s32 2, %v1053
        %v1055 = vrot.slane %v1039, %v1054
        %v1056 = vlaneseq
        %v1057 = vshrl.u32 %v1056, 7
        %v1058 = vsub.s32 3, %v1057
        %v1059 = vrot.slane %v1039, %v1058
        %v1060 = vlaneseq
        %v1061 = vshrl.u32 %v1060, 7
        %v1062 = vsub.s32 4, %v1061
        %v1063 = vrot.slane %v1039, %v1062
        %v1064 = vlaneseq
        %v1065 = vshrl.u32 %v1064, 7
        %v1066 = vsub.s32 5, %v1065
        %v1067 = vrot.slane %v1039, %v1066
        %v1068 = vlaneseq
        %v1069 = vshrl.u32 %v1068, 7
        %v1070 = vsub.s32 6, %v1069
        %v1071 = vrot.slane %v1039, %v1070
        %v1072 = vlaneseq
        %v1073 = vshrl.u32 %v1072, 7
        %v1074 = vsub.s32 7, %v1073
        %v1075 = vrot.slane %v1039, %v1074
        %v1076 = vlaneseq
        %v1077 = vshrl.u32 %v1076, 7
        %v1078 = vsub.s32 0, %v1077
        %v1079 = vrot.slane %v1041, %v1078
        %v1089 = vmul.f32 %v1027, %v1047
        %v1090 = vmul.f32 %v1028, %v1051
        %v1091 = vmul.f32 %v1029, %v1055
        %v1092 = vmul.f32 %v1030, %v1059
        %v1093 = vmul.f32 %v1031, %v1063
        %v1094 = vmul.f32 %v1032, %v1067
        %v1095 = vmul.f32 %v1033, %v1071
        %v1096 = vmul.f32 %v1034, %v1075
        %v1097 = vmul.f32 %v1035, %v1079
        %v1098 = vadd.f32 %v956, %v1089
        %v1099 = vadd.f32 %v957, %v1090
        %v1100 = vadd.f32 %v958, %v1091
        %v1101 = vadd.f32 %v959, %v1092
        %v1102 = vadd.f32 %v960, %v1093
        %v1103 = vadd.f32 %v961, %v1094
        %v1104 = vadd.f32 %v962, %v1095
        %v1105 = vadd.f32 %v963, %v1096
        %v1106 = vadd.f32 %v964, %v1097
        %s1107 = sld [smem:[#allocation3 + $0x100]]
        %s1108 = sld [smem:[#allocation3 + $0x101]]
        %s1109 = sld [smem:[#allocation3 + $0x102]]
        %s1110 = sld [smem:[#allocation6 + $0x2]]
        %v1111 = vstv %s1107
        %v1112 = vmul.f32 %v806, %v1111
        %v1113 = vmul.f32 %v807, %v1111
        %v1114 = vmul.f32 %v808, %v1111
        %v1115 = vmul.f32 %v809, %v1111
        %v1116 = vmul.f32 %v810, %v1111
        %v1117 = vmul.f32 %v811, %v1111
        %v1118 = vmul.f32 %v812, %v1111
        %v1119 = vmul.f32 %v813, %v1111
        %v1120 = vmul.f32 %v814, %v1111
        %v1121 = vstv %s1108
        %v1122 = vmul.f32 %v519, %v1121
        %v1123 = vmul.f32 %v521, %v1121
        %v1124 = vmul.f32 %v590, %v1121
        %v1125 = vmul.f32 %v592, %v1121
        %v1126 = vmul.f32 %v661, %v1121
        %v1127 = vmul.f32 %v663, %v1121
        %v1128 = vmul.f32 %v732, %v1121
        %v1129 = vmul.f32 %v734, %v1121
        %v1130 = vmul.f32 %v803, %v1121
        %v1131 = vadd.f32 %v1112, %v1122
        %v1132 = vadd.f32 %v1113, %v1123
        %v1133 = vadd.f32 %v1114, %v1124
        %v1134 = vadd.f32 %v1115, %v1125
        %v1135 = vadd.f32 %v1116, %v1126
        %v1136 = vadd.f32 %v1117, %v1127
        %v1137 = vadd.f32 %v1118, %v1128
        %v1138 = vadd.f32 %v1119, %v1129
        %v1139 = vadd.f32 %v1120, %v1130
        %v1140 = vstv %s1109
        %v1141 = vmul.f32 %v815, %v1140
        %v1142 = vmul.f32 %v816, %v1140
        %v1143 = vmul.f32 %v817, %v1140
        %v1144 = vmul.f32 %v818, %v1140
        %v1145 = vmul.f32 %v819, %v1140
        %v1146 = vmul.f32 %v820, %v1140
        %v1147 = vmul.f32 %v821, %v1140
        %v1148 = vmul.f32 %v822, %v1140
        %v1149 = vmul.f32 %v823, %v1140
        %v1150 = vadd.f32 %v1131, %v1141
        %v1151 = vadd.f32 %v1132, %v1142
        %v1152 = vadd.f32 %v1133, %v1143
        %v1153 = vadd.f32 %v1134, %v1144
        %v1154 = vadd.f32 %v1135, %v1145
        %v1155 = vadd.f32 %v1136, %v1146
        %v1156 = vadd.f32 %v1137, %v1147
        %v1157 = vadd.f32 %v1138, %v1148
        %v1158 = vadd.f32 %v1139, %v1149
        %v1159 = vstv %s1110
        %v1160 = vadd.f32 %v1150, %v1159
        %v1161 = vadd.f32 %v1151, %v1159
        %v1162 = vadd.f32 %v1152, %v1159
        %v1163 = vadd.f32 %v1153, %v1159
        %v1164 = vadd.f32 %v1154, %v1159
        %v1165 = vadd.f32 %v1155, %v1159
        %v1166 = vadd.f32 %v1156, %v1159
        %v1167 = vadd.f32 %v1157, %v1159
        %v1168 = vadd.f32 %v1158, %v1159
        %v1169 = vmax.f32 %v1160, 0.0
        %v1170 = vmax.f32 %v1161, 0.0
        %v1171 = vmax.f32 %v1162, 0.0
        %v1172 = vmax.f32 %v1163, 0.0
        %v1173 = vmax.f32 %v1164, 0.0
        %v1174 = vmax.f32 %v1165, 0.0
        %v1175 = vmax.f32 %v1166, 0.0
        %v1176 = vmax.f32 %v1167, 0.0
        %v1177 = vmax.f32 %v1168, 0.0
        %s1178 = scalar_lea.vmem [#allocation12], 2
        %v1179 = vld [vmem:[%s1178] ss:$8 sm:$0xf]
        %v1180 = vld [vmem:[%s1178] ss:$8 sm:$0xf0]
        %v1181 = vor.u32 %v1179, %v1180
        %s1182 = scalar_lea.vmem [#allocation12], 66
        %v1183 = vld [vmem:[%s1182] ss:$8 sm:$0x1]
        %v1186 = vlaneseq
        %v1187 = vshrl.u32 %v1186, 7
        %v1188 = vsub.s32 0, %v1187
        %v1189 = vrot.slane %v1181, %v1188
        %v1190 = vlaneseq
        %v1191 = vshrl.u32 %v1190, 7
        %v1192 = vsub.s32 1, %v1191
        %v1193 = vrot.slane %v1181, %v1192
        %v1194 = vlaneseq
        %v1195 = vshrl.u32 %v1194, 7
        %v1196 = vsub.s32 2, %v1195
        %v1197 = vrot.slane %v1181, %v1196
        %v1198 = vlaneseq
        %v1199 = vshrl.u32 %v1198, 7
        %v1200 = vsub.s32 3, %v1199
        %v1201 = vrot.slane %v1181, %v1200
        %v1202 = vlaneseq
        %v1203 = vshrl.u32 %v1202, 7
        %v1204 = vsub.s32 4, %v1203
        %v1205 = vrot.slane %v1181, %v1204
        %v1206 = vlaneseq
        %v1207 = vshrl.u32 %v1206, 7
        %v1208 = vsub.s32 5, %v1207
        %v1209 = vrot.slane %v1181, %v1208
        %v1210 = vlaneseq
        %v1211 = vshrl.u32 %v1210, 7
        %v1212 = vsub.s32 6, %v1211
        %v1213 = vrot.slane %v1181, %v1212
        %v1214 = vlaneseq
        %v1215 = vshrl.u32 %v1214, 7
        %v1216 = vsub.s32 7, %v1215
        %v1217 = vrot.slane %v1181, %v1216
        %v1218 = vlaneseq
        %v1219 = vshrl.u32 %v1218, 7
        %v1220 = vsub.s32 0, %v1219
        %v1221 = vrot.slane %v1183, %v1220
        %v1231 = vmul.f32 %v1169, %v1189
        %v1232 = vmul.f32 %v1170, %v1193
        %v1233 = vmul.f32 %v1171, %v1197
        %v1234 = vmul.f32 %v1172, %v1201
        %v1235 = vmul.f32 %v1173, %v1205
        %v1236 = vmul.f32 %v1174, %v1209
        %v1237 = vmul.f32 %v1175, %v1213
        %v1238 = vmul.f32 %v1176, %v1217
        %v1239 = vmul.f32 %v1177, %v1221
        %v1240 = vadd.f32 %v1098, %v1231
        %v1241 = vadd.f32 %v1099, %v1232
        %v1242 = vadd.f32 %v1100, %v1233
        %v1243 = vadd.f32 %v1101, %v1234
        %v1244 = vadd.f32 %v1102, %v1235
        %v1245 = vadd.f32 %v1103, %v1236
        %v1246 = vadd.f32 %v1104, %v1237
        %v1247 = vadd.f32 %v1105, %v1238
        %v1248 = vadd.f32 %v1106, %v1239
        %s1249 = sld [smem:[#allocation3 + $0x180]]
        %s1250 = sld [smem:[#allocation3 + $0x181]]
        %s1251 = sld [smem:[#allocation3 + $0x182]]
        %s1252 = sld [smem:[#allocation6 + $0x3]]
        %v1253 = vstv %s1249
        %v1254 = vmul.f32 %v806, %v1253
        %v1255 = vmul.f32 %v807, %v1253
        %v1256 = vmul.f32 %v808, %v1253
        %v1257 = vmul.f32 %v809, %v1253
        %v1258 = vmul.f32 %v810, %v1253
        %v1259 = vmul.f32 %v811, %v1253
        %v1260 = vmul.f32 %v812, %v1253
        %v1261 = vmul.f32 %v813, %v1253
        %v1262 = vmul.f32 %v814, %v1253
        %v1263 = vstv %s1250
        %v1264 = vmul.f32 %v519, %v1263
        %v1265 = vmul.f32 %v521, %v1263
        %v1266 = vmul.f32 %v590, %v1263
        %v1267 = vmul.f32 %v592, %v1263
        %v1268 = vmul.f32 %v661, %v1263
        %v1269 = vmul.f32 %v663, %v1263
        %v1270 = vmul.f32 %v732, %v1263
        %v1271 = vmul.f32 %v734, %v1263
        %v1272 = vmul.f32 %v803, %v1263
        %v1273 = vadd.f32 %v1254, %v1264
        %v1274 = vadd.f32 %v1255, %v1265
        %v1275 = vadd.f32 %v1256, %v1266
        %v1276 = vadd.f32 %v1257, %v1267
        %v1277 = vadd.f32 %v1258, %v1268
        %v1278 = vadd.f32 %v1259, %v1269
        %v1279 = vadd.f32 %v1260, %v1270
        %v1280 = vadd.f32 %v1261, %v1271
        %v1281 = vadd.f32 %v1262, %v1272
        %v1282 = vstv %s1251
        %v1283 = vmul.f32 %v815, %v1282
        %v1284 = vmul.f32 %v816, %v1282
        %v1285 = vmul.f32 %v817, %v1282
        %v1286 = vmul.f32 %v818, %v1282
        %v1287 = vmul.f32 %v819, %v1282
        %v1288 = vmul.f32 %v820, %v1282
        %v1289 = vmul.f32 %v821, %v1282
        %v1290 = vmul.f32 %v822, %v1282
        %v1291 = vmul.f32 %v823, %v1282
        %v1292 = vadd.f32 %v1273, %v1283
        %v1293 = vadd.f32 %v1274, %v1284
        %v1294 = vadd.f32 %v1275, %v1285
        %v1295 = vadd.f32 %v1276, %v1286
        %v1296 = vadd.f32 %v1277, %v1287
        %v1297 = vadd.f32 %v1278, %v1288
        %v1298 = vadd.f32 %v1279, %v1289
        %v1299 = vadd.f32 %v1280, %v1290
        %v1300 = vadd.f32 %v1281, %v1291
        %v1301 = vstv %s1252
        %v1302 = vadd.f32 %v1292, %v1301
        %v1303 = vadd.f32 %v1293, %v1301
        %v1304 = vadd.f32 %v1294, %v1301
        %v1305 = vadd.f32 %v1295, %v1301
        %v1306 = vadd.f32 %v1296, %v1301
        %v1307 = vadd.f32 %v1297, %v1301
        %v1308 = vadd.f32 %v1298, %v1301
        %v1309 = vadd.f32 %v1299, %v1301
        %v1310 = vadd.f32 %v1300, %v1301
        %v1311 = vmax.f32 %v1302, 0.0
        %v1312 = vmax.f32 %v1303, 0.0
        %v1313 = vmax.f32 %v1304, 0.0
        %v1314 = vmax.f32 %v1305, 0.0
        %v1315 = vmax.f32 %v1306, 0.0
        %v1316 = vmax.f32 %v1307, 0.0
        %v1317 = vmax.f32 %v1308, 0.0
        %v1318 = vmax.f32 %v1309, 0.0
        %v1319 = vmax.f32 %v1310, 0.0
        %s1320 = scalar_lea.vmem [#allocation12], 3
        %v1321 = vld [vmem:[%s1320] ss:$8 sm:$0xf]
        %v1322 = vld [vmem:[%s1320] ss:$8 sm:$0xf0]
        %v1323 = vor.u32 %v1321, %v1322
        %s1324 = scalar_lea.vmem [#allocation12], 67
        %v1325 = vld [vmem:[%s1324] ss:$8 sm:$0x1]
        %v1328 = vlaneseq
        %v1329 = vshrl.u32 %v1328, 7
        %v1330 = vsub.s32 0, %v1329
        %v1331 = vrot.slane %v1323, %v1330
        %v1332 = vlaneseq
        %v1333 = vshrl.u32 %v1332, 7
        %v1334 = vsub.s32 1, %v1333
        %v1335 = vrot.slane %v1323, %v1334
        %v1336 = vlaneseq
        %v1337 = vshrl.u32 %v1336, 7
        %v1338 = vsub.s32 2, %v1337
        %v1339 = vrot.slane %v1323, %v1338
        %v1340 = vlaneseq
        %v1341 = vshrl.u32 %v1340, 7
        %v1342 = vsub.s32 3, %v1341
        %v1343 = vrot.slane %v1323, %v1342
        %v1344 = vlaneseq
        %v1345 = vshrl.u32 %v1344, 7
        %v1346 = vsub.s32 4, %v1345
        %v1347 = vrot.slane %v1323, %v1346
        %v1348 = vlaneseq
        %v1349 = vshrl.u32 %v1348, 7
        %v1350 = vsub.s32 5, %v1349
        %v1351 = vrot.slane %v1323, %v1350
        %v1352 = vlaneseq
        %v1353 = vshrl.u32 %v1352, 7
        %v1354 = vsub.s32 6, %v1353
        %v1355 = vrot.slane %v1323, %v1354
        %v1356 = vlaneseq
        %v1357 = vshrl.u32 %v1356, 7
        %v1358 = vsub.s32 7, %v1357
        %v1359 = vrot.slane %v1323, %v1358
        %v1360 = vlaneseq
        %v1361 = vshrl.u32 %v1360, 7
        %v1362 = vsub.s32 0, %v1361
        %v1363 = vrot.slane %v1325, %v1362
        %v1373 = vmul.f32 %v1311, %v1331
        %v1374 = vmul.f32 %v1312, %v1335
        %v1375 = vmul.f32 %v1313, %v1339
        %v1376 = vmul.f32 %v1314, %v1343
        %v1377 = vmul.f32 %v1315, %v1347
        %v1378 = vmul.f32 %v1316, %v1351
        %v1379 = vmul.f32 %v1317, %v1355
        %v1380 = vmul.f32 %v1318, %v1359
        %v1381 = vmul.f32 %v1319, %v1363
        %v1382 = vadd.f32 %v1240, %v1373
        %v1383 = vadd.f32 %v1241, %v1374
        %v1384 = vadd.f32 %v1242, %v1375
        %v1385 = vadd.f32 %v1243, %v1376
        %v1386 = vadd.f32 %v1244, %v1377
        %v1387 = vadd.f32 %v1245, %v1378
        %v1388 = vadd.f32 %v1246, %v1379
        %v1389 = vadd.f32 %v1247, %v1380
        %v1390 = vadd.f32 %v1248, %v1381
        %s1391 = sld [smem:[#allocation3 + $0x200]]
        %s1392 = sld [smem:[#allocation3 + $0x201]]
        %s1393 = sld [smem:[#allocation3 + $0x202]]
        %s1394 = sld [smem:[#allocation6 + $0x4]]
        %v1395 = vstv %s1391
        %v1396 = vmul.f32 %v806, %v1395
        %v1397 = vmul.f32 %v807, %v1395
        %v1398 = vmul.f32 %v808, %v1395
        %v1399 = vmul.f32 %v809, %v1395
        %v1400 = vmul.f32 %v810, %v1395
        %v1401 = vmul.f32 %v811, %v1395
        %v1402 = vmul.f32 %v812, %v1395
        %v1403 = vmul.f32 %v813, %v1395
        %v1404 = vmul.f32 %v814, %v1395
        %v1405 = vstv %s1392
        %v1406 = vmul.f32 %v519, %v1405
        %v1407 = vmul.f32 %v521, %v1405
        %v1408 = vmul.f32 %v590, %v1405
        %v1409 = vmul.f32 %v592, %v1405
        %v1410 = vmul.f32 %v661, %v1405
        %v1411 = vmul.f32 %v663, %v1405
        %v1412 = vmul.f32 %v732, %v1405
        %v1413 = vmul.f32 %v734, %v1405
        %v1414 = vmul.f32 %v803, %v1405
        %v1415 = vadd.f32 %v1396, %v1406
        %v1416 = vadd.f32 %v1397, %v1407
        %v1417 = vadd.f32 %v1398, %v1408
        %v1418 = vadd.f32 %v1399, %v1409
        %v1419 = vadd.f32 %v1400, %v1410
        %v1420 = vadd.f32 %v1401, %v1411
        %v1421 = vadd.f32 %v1402, %v1412
        %v1422 = vadd.f32 %v1403, %v1413
        %v1423 = vadd.f32 %v1404, %v1414
        %v1424 = vstv %s1393
        %v1425 = vmul.f32 %v815, %v1424
        %v1426 = vmul.f32 %v816, %v1424
        %v1427 = vmul.f32 %v817, %v1424
        %v1428 = vmul.f32 %v818, %v1424
        %v1429 = vmul.f32 %v819, %v1424
        %v1430 = vmul.f32 %v820, %v1424
        %v1431 = vmul.f32 %v821, %v1424
        %v1432 = vmul.f32 %v822, %v1424
        %v1433 = vmul.f32 %v823, %v1424
        %v1434 = vadd.f32 %v1415, %v1425
        %v1435 = vadd.f32 %v1416, %v1426
        %v1436 = vadd.f32 %v1417, %v1427
        %v1437 = vadd.f32 %v1418, %v1428
        %v1438 = vadd.f32 %v1419, %v1429
        %v1439 = vadd.f32 %v1420, %v1430
        %v1440 = vadd.f32 %v1421, %v1431
        %v1441 = vadd.f32 %v1422, %v1432
        %v1442 = vadd.f32 %v1423, %v1433
        %v1443 = vstv %s1394
        %v1444 = vadd.f32 %v1434, %v1443
        %v1445 = vadd.f32 %v1435, %v1443
        %v1446 = vadd.f32 %v1436, %v1443
        %v1447 = vadd.f32 %v1437, %v1443
        %v1448 = vadd.f32 %v1438, %v1443
        %v1449 = vadd.f32 %v1439, %v1443
        %v1450 = vadd.f32 %v1440, %v1443
        %v1451 = vadd.f32 %v1441, %v1443
        %v1452 = vadd.f32 %v1442, %v1443
        %v1453 = vmax.f32 %v1444, 0.0
        %v1454 = vmax.f32 %v1445, 0.0
        %v1455 = vmax.f32 %v1446, 0.0
        %v1456 = vmax.f32 %v1447, 0.0
        %v1457 = vmax.f32 %v1448, 0.0
        %v1458 = vmax.f32 %v1449, 0.0
        %v1459 = vmax.f32 %v1450, 0.0
        %v1460 = vmax.f32 %v1451, 0.0
        %v1461 = vmax.f32 %v1452, 0.0
        %s1462 = scalar_lea.vmem [#allocation12], 4
        %v1463 = vld [vmem:[%s1462] ss:$8 sm:$0xf]
        %v1464 = vld [vmem:[%s1462] ss:$8 sm:$0xf0]
        %v1465 = vor.u32 %v1463, %v1464
        %s1466 = scalar_lea.vmem [#allocation12], 68
        %v1467 = vld [vmem:[%s1466] ss:$8 sm:$0x1]
        %v1470 = vlaneseq
        %v1471 = vshrl.u32 %v1470, 7
        %v1472 = vsub.s32 0, %v1471
        %v1473 = vrot.slane %v1465, %v1472
        %v1474 = vlaneseq
        %v1475 = vshrl.u32 %v1474, 7
        %v1476 = vsub.s32 1, %v1475
        %v1477 = vrot.slane %v1465, %v1476
        %v1478 = vlaneseq
        %v1479 = vshrl.u32 %v1478, 7
        %v1480 = vsub.s32 2, %v1479
        %v1481 = vrot.slane %v1465, %v1480
        %v1482 = vlaneseq
        %v1483 = vshrl.u32 %v1482, 7
        %v1484 = vsub.s32 3, %v1483
        %v1485 = vrot.slane %v1465, %v1484
        %v1486 = vlaneseq
        %v1487 = vshrl.u32 %v1486, 7
        %v1488 = vsub.s32 4, %v1487
        %v1489 = vrot.slane %v1465, %v1488
        %v1490 = vlaneseq
        %v1491 = vshrl.u32 %v1490, 7
        %v1492 = vsub.s32 5, %v1491
        %v1493 = vrot.slane %v1465, %v1492
        %v1494 = vlaneseq
        %v1495 = vshrl.u32 %v1494, 7
        %v1496 = vsub.s32 6, %v1495
        %v1497 = vrot.slane %v1465, %v1496
        %v1498 = vlaneseq
        %v1499 = vshrl.u32 %v1498, 7
        %v1500 = vsub.s32 7, %v1499
        %v1501 = vrot.slane %v1465, %v1500
        %v1502 = vlaneseq
        %v1503 = vshrl.u32 %v1502, 7
        %v1504 = vsub.s32 0, %v1503
        %v1505 = vrot.slane %v1467, %v1504
        %v1515 = vmul.f32 %v1453, %v1473
        %v1516 = vmul.f32 %v1454, %v1477
        %v1517 = vmul.f32 %v1455, %v1481
        %v1518 = vmul.f32 %v1456, %v1485
        %v1519 = vmul.f32 %v1457, %v1489
        %v1520 = vmul.f32 %v1458, %v1493
        %v1521 = vmul.f32 %v1459, %v1497
        %v1522 = vmul.f32 %v1460, %v1501
        %v1523 = vmul.f32 %v1461, %v1505
        %v1524 = vadd.f32 %v1382, %v1515
        %v1525 = vadd.f32 %v1383, %v1516
        %v1526 = vadd.f32 %v1384, %v1517
        %v1527 = vadd.f32 %v1385, %v1518
        %v1528 = vadd.f32 %v1386, %v1519
        %v1529 = vadd.f32 %v1387, %v1520
        %v1530 = vadd.f32 %v1388, %v1521
        %v1531 = vadd.f32 %v1389, %v1522
        %v1532 = vadd.f32 %v1390, %v1523
        %s1533 = sld [smem:[#allocation3 + $0x280]]
        %s1534 = sld [smem:[#allocation3 + $0x281]]
        %s1535 = sld [smem:[#allocation3 + $0x282]]
        %s1536 = sld [smem:[#allocation6 + $0x5]]
        %v1537 = vstv %s1533
        %v1538 = vmul.f32 %v806, %v1537
        %v1539 = vmul.f32 %v807, %v1537
        %v1540 = vmul.f32 %v808, %v1537
        %v1541 = vmul.f32 %v809, %v1537
        %v1542 = vmul.f32 %v810, %v1537
        %v1543 = vmul.f32 %v811, %v1537
        %v1544 = vmul.f32 %v812, %v1537
        %v1545 = vmul.f32 %v813, %v1537
        %v1546 = vmul.f32 %v814, %v1537
        %v1547 = vstv %s1534
        %v1548 = vmul.f32 %v519, %v1547
        %v1549 = vmul.f32 %v521, %v1547
        %v1550 = vmul.f32 %v590, %v1547
        %v1551 = vmul.f32 %v592, %v1547
        %v1552 = vmul.f32 %v661, %v1547
        %v1553 = vmul.f32 %v663, %v1547
        %v1554 = vmul.f32 %v732, %v1547
        %v1555 = vmul.f32 %v734, %v1547
        %v1556 = vmul.f32 %v803, %v1547
        %v1557 = vadd.f32 %v1538, %v1548
        %v1558 = vadd.f32 %v1539, %v1549
        %v1559 = vadd.f32 %v1540, %v1550
        %v1560 = vadd.f32 %v1541, %v1551
        %v1561 = vadd.f32 %v1542, %v1552
        %v1562 = vadd.f32 %v1543, %v1553
        %v1563 = vadd.f32 %v1544, %v1554
        %v1564 = vadd.f32 %v1545, %v1555
        %v1565 = vadd.f32 %v1546, %v1556
        %v1566 = vstv %s1535
        %v1567 = vmul.f32 %v815, %v1566
        %v1568 = vmul.f32 %v816, %v1566
        %v1569 = vmul.f32 %v817, %v1566
        %v1570 = vmul.f32 %v818, %v1566
        %v1571 = vmul.f32 %v819, %v1566
        %v1572 = vmul.f32 %v820, %v1566
        %v1573 = vmul.f32 %v821, %v1566
        %v1574 = vmul.f32 %v822, %v1566
        %v1575 = vmul.f32 %v823, %v1566
        %v1576 = vadd.f32 %v1557, %v1567
        %v1577 = vadd.f32 %v1558, %v1568
        %v1578 = vadd.f32 %v1559, %v1569
        %v1579 = vadd.f32 %v1560, %v1570
        %v1580 = vadd.f32 %v1561, %v1571
        %v1581 = vadd.f32 %v1562, %v1572
        %v1582 = vadd.f32 %v1563, %v1573
        %v1583 = vadd.f32 %v1564, %v1574
        %v1584 = vadd.f32 %v1565, %v1575
        %v1585 = vstv %s1536
        %v1586 = vadd.f32 %v1576, %v1585
        %v1587 = vadd.f32 %v1577, %v1585
        %v1588 = vadd.f32 %v1578, %v1585
        %v1589 = vadd.f32 %v1579, %v1585
        %v1590 = vadd.f32 %v1580, %v1585
        %v1591 = vadd.f32 %v1581, %v1585
        %v1592 = vadd.f32 %v1582, %v1585
        %v1593 = vadd.f32 %v1583, %v1585
        %v1594 = vadd.f32 %v1584, %v1585
        %v1595 = vmax.f32 %v1586, 0.0
        %v1596 = vmax.f32 %v1587, 0.0
        %v1597 = vmax.f32 %v1588, 0.0
        %v1598 = vmax.f32 %v1589, 0.0
        %v1599 = vmax.f32 %v1590, 0.0
        %v1600 = vmax.f32 %v1591, 0.0
        %v1601 = vmax.f32 %v1592, 0.0
        %v1602 = vmax.f32 %v1593, 0.0
        %v1603 = vmax.f32 %v1594, 0.0
        %s1604 = scalar_lea.vmem [#allocation12], 5
        %v1605 = vld [vmem:[%s1604] ss:$8 sm:$0xf]
        %v1606 = vld [vmem:[%s1604] ss:$8 sm:$0xf0]
        %v1607 = vor.u32 %v1605, %v1606
        %s1608 = scalar_lea.vmem [#allocation12], 69
        %v1609 = vld [vmem:[%s1608] ss:$8 sm:$0x1]
        %v1612 = vlaneseq
        %v1613 = vshrl.u32 %v1612, 7
        %v1614 = vsub.s32 0, %v1613
        %v1615 = vrot.slane %v1607, %v1614
        %v1616 = vlaneseq
        %v1617 = vshrl.u32 %v1616, 7
        %v1618 = vsub.s32 1, %v1617
        %v1619 = vrot.slane %v1607, %v1618
        %v1620 = vlaneseq
        %v1621 = vshrl.u32 %v1620, 7
        %v1622 = vsub.s32 2, %v1621
        %v1623 = vrot.slane %v1607, %v1622
        %v1624 = vlaneseq
        %v1625 = vshrl.u32 %v1624, 7
        %v1626 = vsub.s32 3, %v1625
        %v1627 = vrot.slane %v1607, %v1626
        %v1628 = vlaneseq
        %v1629 = vshrl.u32 %v1628, 7
        %v1630 = vsub.s32 4, %v1629
        %v1631 = vrot.slane %v1607, %v1630
        %v1632 = vlaneseq
        %v1633 = vshrl.u32 %v1632, 7
        %v1634 = vsub.s32 5, %v1633
        %v1635 = vrot.slane %v1607, %v1634
        %v1636 = vlaneseq
        %v1637 = vshrl.u32 %v1636, 7
        %v1638 = vsub.s32 6, %v1637
        %v1639 = vrot.slane %v1607, %v1638
        %v1640 = vlaneseq
        %v1641 = vshrl.u32 %v1640, 7
        %v1642 = vsub.s32 7, %v1641
        %v1643 = vrot.slane %v1607, %v1642
        %v1644 = vlaneseq
        %v1645 = vshrl.u32 %v1644, 7
        %v1646 = vsub.s32 0, %v1645
        %v1647 = vrot.slane %v1609, %v1646
        %v1657 = vmul.f32 %v1595, %v1615
        %v1658 = vmul.f32 %v1596, %v1619
        %v1659 = vmul.f32 %v1597, %v1623
        %v1660 = vmul.f32 %v1598, %v1627
        %v1661 = vmul.f32 %v1599, %v1631
        %v1662 = vmul.f32 %v1600, %v1635
        %v1663 = vmul.f32 %v1601, %v1639
        %v1664 = vmul.f32 %v1602, %v1643
        %v1665 = vmul.f32 %v1603, %v1647
        %v1666 = vadd.f32 %v1524, %v1657
        %v1667 = vadd.f32 %v1525, %v1658
        %v1668 = vadd.f32 %v1526, %v1659
        %v1669 = vadd.f32 %v1527, %v1660
        %v1670 = vadd.f32 %v1528, %v1661
        %v1671 = vadd.f32 %v1529, %v1662
        %v1672 = vadd.f32 %v1530, %v1663
        %v1673 = vadd.f32 %v1531, %v1664
        %v1674 = vadd.f32 %v1532, %v1665
        %s1675 = sld [smem:[#allocation3 + $0x300]]
        %s1676 = sld [smem:[#allocation3 + $0x301]]
        %s1677 = sld [smem:[#allocation3 + $0x302]]
        %s1678 = sld [smem:[#allocation6 + $0x6]]
        %v1679 = vstv %s1675
        %v1680 = vmul.f32 %v806, %v1679
        %v1681 = vmul.f32 %v807, %v1679
        %v1682 = vmul.f32 %v808, %v1679
        %v1683 = vmul.f32 %v809, %v1679
        %v1684 = vmul.f32 %v810, %v1679
        %v1685 = vmul.f32 %v811, %v1679
        %v1686 = vmul.f32 %v812, %v1679
        %v1687 = vmul.f32 %v813, %v1679
        %v1688 = vmul.f32 %v814, %v1679
        %v1689 = vstv %s1676
        %v1690 = vmul.f32 %v519, %v1689
        %v1691 = vmul.f32 %v521, %v1689
        %v1692 = vmul.f32 %v590, %v1689
        %v1693 = vmul.f32 %v592, %v1689
        %v1694 = vmul.f32 %v661, %v1689
        %v1695 = vmul.f32 %v663, %v1689
        %v1696 = vmul.f32 %v732, %v1689
        %v1697 = vmul.f32 %v734, %v1689
        %v1698 = vmul.f32 %v803, %v1689
        %v1699 = vadd.f32 %v1680, %v1690
        %v1700 = vadd.f32 %v1681, %v1691
        %v1701 = vadd.f32 %v1682, %v1692
        %v1702 = vadd.f32 %v1683, %v1693
        %v1703 = vadd.f32 %v1684, %v1694
        %v1704 = vadd.f32 %v1685, %v1695
        %v1705 = vadd.f32 %v1686, %v1696
        %v1706 = vadd.f32 %v1687, %v1697
        %v1707 = vadd.f32 %v1688, %v1698
        %v1708 = vstv %s1677
        %v1709 = vmul.f32 %v815, %v1708
        %v1710 = vmul.f32 %v816, %v1708
        %v1711 = vmul.f32 %v817, %v1708
        %v1712 = vmul.f32 %v818, %v1708
        %v1713 = vmul.f32 %v819, %v1708
        %v1714 = vmul.f32 %v820, %v1708
        %v1715 = vmul.f32 %v821, %v1708
        %v1716 = vmul.f32 %v822, %v1708
        %v1717 = vmul.f32 %v823, %v1708
        %v1718 = vadd.f32 %v1699, %v1709
        %v1719 = vadd.f32 %v1700, %v1710
        %v1720 = vadd.f32 %v1701, %v1711
        %v1721 = vadd.f32 %v1702, %v1712
        %v1722 = vadd.f32 %v1703, %v1713
        %v1723 = vadd.f32 %v1704, %v1714
        %v1724 = vadd.f32 %v1705, %v1715
        %v1725 = vadd.f32 %v1706, %v1716
        %v1726 = vadd.f32 %v1707, %v1717
        %v1727 = vstv %s1678
        %v1728 = vadd.f32 %v1718, %v1727
        %v1729 = vadd.f32 %v1719, %v1727
        %v1730 = vadd.f32 %v1720, %v1727
        %v1731 = vadd.f32 %v1721, %v1727
        %v1732 = vadd.f32 %v1722, %v1727
        %v1733 = vadd.f32 %v1723, %v1727
        %v1734 = vadd.f32 %v1724, %v1727
        %v1735 = vadd.f32 %v1725, %v1727
        %v1736 = vadd.f32 %v1726, %v1727
        %v1737 = vmax.f32 %v1728, 0.0
        %v1738 = vmax.f32 %v1729, 0.0
        %v1739 = vmax.f32 %v1730, 0.0
        %v1740 = vmax.f32 %v1731, 0.0
        %v1741 = vmax.f32 %v1732, 0.0
        %v1742 = vmax.f32 %v1733, 0.0
        %v1743 = vmax.f32 %v1734, 0.0
        %v1744 = vmax.f32 %v1735, 0.0
        %v1745 = vmax.f32 %v1736, 0.0
        %s1746 = scalar_lea.vmem [#allocation12], 6
        %v1747 = vld [vmem:[%s1746] ss:$8 sm:$0xf]
        %v1748 = vld [vmem:[%s1746] ss:$8 sm:$0xf0]
        %v1749 = vor.u32 %v1747, %v1748
        %s1750 = scalar_lea.vmem [#allocation12], 70
        %v1751 = vld [vmem:[%s1750] ss:$8 sm:$0x1]
        %v1754 = vlaneseq
        %v1755 = vshrl.u32 %v1754, 7
        %v1756 = vsub.s32 0, %v1755
        %v1757 = vrot.slane %v1749, %v1756
        %v1758 = vlaneseq
        %v1759 = vshrl.u32 %v1758, 7
        %v1760 = vsub.s32 1, %v1759
        %v1761 = vrot.slane %v1749, %v1760
        %v1762 = vlaneseq
        %v1763 = vshrl.u32 %v1762, 7
        %v1764 = vsub.s32 2, %v1763
        %v1765 = vrot.slane %v1749, %v1764
        %v1766 = vlaneseq
        %v1767 = vshrl.u32 %v1766, 7
        %v1768 = vsub.s32 3, %v1767
        %v1769 = vrot.slane %v1749, %v1768
        %v1770 = vlaneseq
        %v1771 = vshrl.u32 %v1770, 7
        %v1772 = vsub.s32 4, %v1771
        %v1773 = vrot.slane %v1749, %v1772
        %v1774 = vlaneseq
        %v1775 = vshrl.u32 %v1774, 7
        %v1776 = vsub.s32 5, %v1775
        %v1777 = vrot.slane %v1749, %v1776
        %v1778 = vlaneseq
        %v1779 = vshrl.u32 %v1778, 7
        %v1780 = vsub.s32 6, %v1779
        %v1781 = vrot.slane %v1749, %v1780
        %v1782 = vlaneseq
        %v1783 = vshrl.u32 %v1782, 7
        %v1784 = vsub.s32 7, %v1783
        %v1785 = vrot.slane %v1749, %v1784
        %v1786 = vlaneseq
        %v1787 = vshrl.u32 %v1786, 7
        %v1788 = vsub.s32 0, %v1787
        %v1789 = vrot.slane %v1751, %v1788
        %v1799 = vmul.f32 %v1737, %v1757
        %v1800 = vmul.f32 %v1738, %v1761
        %v1801 = vmul.f32 %v1739, %v1765
        %v1802 = vmul.f32 %v1740, %v1769
        %v1803 = vmul.f32 %v1741, %v1773
        %v1804 = vmul.f32 %v1742, %v1777
        %v1805 = vmul.f32 %v1743, %v1781
        %v1806 = vmul.f32 %v1744, %v1785
        %v1807 = vmul.f32 %v1745, %v1789
        %v1808 = vadd.f32 %v1666, %v1799
        %v1809 = vadd.f32 %v1667, %v1800
        %v1810 = vadd.f32 %v1668, %v1801
        %v1811 = vadd.f32 %v1669, %v1802
        %v1812 = vadd.f32 %v1670, %v1803
        %v1813 = vadd.f32 %v1671, %v1804
        %v1814 = vadd.f32 %v1672, %v1805
        %v1815 = vadd.f32 %v1673, %v1806
        %v1816 = vadd.f32 %v1674, %v1807
        %s1817 = sld [smem:[#allocation3 + $0x380]]
        %s1818 = sld [smem:[#allocation3 + $0x381]]
        %s1819 = sld [smem:[#allocation3 + $0x382]]
        %s1820 = sld [smem:[#allocation6 + $0x7]]
        %v1821 = vstv %s1817
        %v1822 = vmul.f32 %v806, %v1821
        %v1823 = vmul.f32 %v807, %v1821
        %v1824 = vmul.f32 %v808, %v1821
        %v1825 = vmul.f32 %v809, %v1821
        %v1826 = vmul.f32 %v810, %v1821
        %v1827 = vmul.f32 %v811, %v1821
        %v1828 = vmul.f32 %v812, %v1821
        %v1829 = vmul.f32 %v813, %v1821
        %v1830 = vmul.f32 %v814, %v1821
        %v1831 = vstv %s1818
        %v1832 = vmul.f32 %v519, %v1831
        %v1833 = vmul.f32 %v521, %v1831
        %v1834 = vmul.f32 %v590, %v1831
        %v1835 = vmul.f32 %v592, %v1831
        %v1836 = vmul.f32 %v661, %v1831
        %v1837 = vmul.f32 %v663, %v1831
        %v1838 = vmul.f32 %v732, %v1831
        %v1839 = vmul.f32 %v734, %v1831
        %v1840 = vmul.f32 %v803, %v1831
        %v1841 = vadd.f32 %v1822, %v1832
        %v1842 = vadd.f32 %v1823, %v1833
        %v1843 = vadd.f32 %v1824, %v1834
        %v1844 = vadd.f32 %v1825, %v1835
        %v1845 = vadd.f32 %v1826, %v1836
        %v1846 = vadd.f32 %v1827, %v1837
        %v1847 = vadd.f32 %v1828, %v1838
        %v1848 = vadd.f32 %v1829, %v1839
        %v1849 = vadd.f32 %v1830, %v1840
        %v1850 = vstv %s1819
        %v1851 = vmul.f32 %v815, %v1850
        %v1852 = vmul.f32 %v816, %v1850
        %v1853 = vmul.f32 %v817, %v1850
        %v1854 = vmul.f32 %v818, %v1850
        %v1855 = vmul.f32 %v819, %v1850
        %v1856 = vmul.f32 %v820, %v1850
        %v1857 = vmul.f32 %v821, %v1850
        %v1858 = vmul.f32 %v822, %v1850
        %v1859 = vmul.f32 %v823, %v1850
        %v1860 = vadd.f32 %v1841, %v1851
        %v1861 = vadd.f32 %v1842, %v1852
        %v1862 = vadd.f32 %v1843, %v1853
        %v1863 = vadd.f32 %v1844, %v1854
        %v1864 = vadd.f32 %v1845, %v1855
        %v1865 = vadd.f32 %v1846, %v1856
        %v1866 = vadd.f32 %v1847, %v1857
        %v1867 = vadd.f32 %v1848, %v1858
        %v1868 = vadd.f32 %v1849, %v1859
        %v1869 = vstv %s1820
        %v1870 = vadd.f32 %v1860, %v1869
        %v1871 = vadd.f32 %v1861, %v1869
        %v1872 = vadd.f32 %v1862, %v1869
        %v1873 = vadd.f32 %v1863, %v1869
        %v1874 = vadd.f32 %v1864, %v1869
        %v1875 = vadd.f32 %v1865, %v1869
        %v1876 = vadd.f32 %v1866, %v1869
        %v1877 = vadd.f32 %v1867, %v1869
        %v1878 = vadd.f32 %v1868, %v1869
        %v1879 = vmax.f32 %v1870, 0.0
        %v1880 = vmax.f32 %v1871, 0.0
        %v1881 = vmax.f32 %v1872, 0.0
        %v1882 = vmax.f32 %v1873, 0.0
        %v1883 = vmax.f32 %v1874, 0.0
        %v1884 = vmax.f32 %v1875, 0.0
        %v1885 = vmax.f32 %v1876, 0.0
        %v1886 = vmax.f32 %v1877, 0.0
        %v1887 = vmax.f32 %v1878, 0.0
        %s1888 = scalar_lea.vmem [#allocation12], 7
        %v1889 = vld [vmem:[%s1888] ss:$8 sm:$0xf]
        %v1890 = vld [vmem:[%s1888] ss:$8 sm:$0xf0]
        %v1891 = vor.u32 %v1889, %v1890
        %s1892 = scalar_lea.vmem [#allocation12], 71
        %v1893 = vld [vmem:[%s1892] ss:$8 sm:$0x1]
        %v1896 = vlaneseq
        %v1897 = vshrl.u32 %v1896, 7
        %v1898 = vsub.s32 0, %v1897
        %v1899 = vrot.slane %v1891, %v1898
        %v1900 = vlaneseq
        %v1901 = vshrl.u32 %v1900, 7
        %v1902 = vsub.s32 1, %v1901
        %v1903 = vrot.slane %v1891, %v1902
        %v1904 = vlaneseq
        %v1905 = vshrl.u32 %v1904, 7
        %v1906 = vsub.s32 2, %v1905
        %v1907 = vrot.slane %v1891, %v1906
        %v1908 = vlaneseq
        %v1909 = vshrl.u32 %v1908, 7
        %v1910 = vsub.s32 3, %v1909
        %v1911 = vrot.slane %v1891, %v1910
        %v1912 = vlaneseq
        %v1913 = vshrl.u32 %v1912, 7
        %v1914 = vsub.s32 4, %v1913
        %v1915 = vrot.slane %v1891, %v1914
        %v1916 = vlaneseq
        %v1917 = vshrl.u32 %v1916, 7
        %v1918 = vsub.s32 5, %v1917
        %v1919 = vrot.slane %v1891, %v1918
        %v1920 = vlaneseq
        %v1921 = vshrl.u32 %v1920, 7
        %v1922 = vsub.s32 6, %v1921
        %v1923 = vrot.slane %v1891, %v1922
        %v1924 = vlaneseq
        %v1925 = vshrl.u32 %v1924, 7
        %v1926 = vsub.s32 7, %v1925
        %v1927 = vrot.slane %v1891, %v1926
        %v1928 = vlaneseq
        %v1929 = vshrl.u32 %v1928, 7
        %v1930 = vsub.s32 0, %v1929
        %v1931 = vrot.slane %v1893, %v1930
        %v1941 = vmul.f32 %v1879, %v1899
        %v1942 = vmul.f32 %v1880, %v1903
        %v1943 = vmul.f32 %v1881, %v1907
        %v1944 = vmul.f32 %v1882, %v1911
        %v1945 = vmul.f32 %v1883, %v1915
        %v1946 = vmul.f32 %v1884, %v1919
        %v1947 = vmul.f32 %v1885, %v1923
        %v1948 = vmul.f32 %v1886, %v1927
        %v1949 = vmul.f32 %v1887, %v1931
        %v1950 = vadd.f32 %v1808, %v1941
        %v1951 = vadd.f32 %v1809, %v1942
        %v1952 = vadd.f32 %v1810, %v1943
        %v1953 = vadd.f32 %v1811, %v1944
        %v1954 = vadd.f32 %v1812, %v1945
        %v1955 = vadd.f32 %v1813, %v1946
        %v1956 = vadd.f32 %v1814, %v1947
        %v1957 = vadd.f32 %v1815, %v1948
        %v1958 = vadd.f32 %v1816, %v1949
        %v1959 = vadd.f32 %v1950, %v1951
        %v1960 = vadd.f32 %v1959, %v1952
        %v1961 = vadd.f32 %v1960, %v1953
        %v1962 = vadd.f32 %v1961, %v1954
        %v1963 = vadd.f32 %v1962, %v1955
        %v1964 = vadd.f32 %v1963, %v1956
        %v1965 = vadd.f32 %v1964, %v1957
        %v1966 = vadd.f32 %v1965, %v1958
        %1967 = vadd.xlane.f32.xlu0 %v1966
        %v1968 = vpop.xlane.xlu0 %1967
        %s1969 = sld [smem:[#allocation2]]
        %v1970 = vstv %s1969
        %v1971 = vadd.f32 %v1968, %v1970
        %vm1972 = vcmask 7168
        %1973 = vst.msk [vmem:[%s429] sm:$0xff] %vm1972, %v1971
        %p1974 = scmp.lt.s32.totalorder %s29, 2
        %s1975 = scalar_select %p1974, %s29, 2
        %s1976 = smul.addr %s1975, 8
        %s1977 = scalar_lea.vmem %s8, %s1976
        // Predicated region
        $region77: #{tpu_custom_call.1} parent=51 // pred_check
          %p1978 = pneg %p230
        $region78: #{tpu_custom_call.1} parent=51 // pred_check_branch
          %1980 = sbr.rel (%p1978) target = $region80
        $region79: #{tpu_custom_call.1} parent=51 // pred_region
          _
        $region80: #{tpu_custom_call.1} parent=51 // pred_fallthru
          _
      $region52: #{tpu_custom_call.1} parent=5 // pred_fallthru
        _
      %p1981 = scmp.le.s32.totalorder 2, %s24
      // Predicated region
      $region81: #{tpu_custom_call.1} parent=5 // pred_check
        %p1982 = pneg %p1981
      $region82: #{tpu_custom_call.1} parent=5 // pred_check_branch
        %1984 = sbr.rel (%p1982) target = $region84
      $region83: #{tpu_custom_call.1} parent=5 // pred_region
        %s1985 = ssub.s32 %s24, 2
        // Predicated region
        $region85: #{tpu_custom_call.1} parent=83 // pred_check
          %p1986 = pneg %p236
        $region86: #{tpu_custom_call.1} parent=83 // pred_check_branch
          %1988 = sbr.rel (%p1986) target = $region88
        $region87: #{tpu_custom_call.1} parent=83 // pred_region
          %p1989 = scmp.lt.s32.totalorder %s30, 2
          %s1990 = scalar_select %p1989, %s30, 2
          %s1991 = smul.addr %s1990, 8
          %s1992 = scalar_lea.vmem %s8, %s1991
        $region88: #{tpu_custom_call.1} parent=83 // pred_fallthru
          _
      $region84: #{tpu_custom_call.1} parent=5 // pred_fallthru
        _
    $region6: #{tpu_custom_call.1} parent=1 // loop_footer
      %s28 = sadd.s32 1, %s24
    $region7: #{tpu_custom_call.1} parent=1 // loop_footer_branch
      %23 = sbr.rel target = $region3
    $region8: #{tpu_custom_call.1} parent=1 // loop_exit
      _
    %1993 = vsyncpa [#allocation4], 1
    %s1994 = scalar_lea.sflag [#allocation4], 1
    %1995 = vsyncpa %s1994, 1
    %1996 = vsyncpa [#allocation10], 1
    %s1997 = scalar_lea.sflag [#allocation10], 1
    %1998 = vsyncpa %s1997, 1
    %1999 = vsyncpa [#allocation13], 1
    %2000 = vsyncpa [#allocation5], 1
    %s2001 = scalar_lea.sflag [#allocation5], 1
    %2002 = vsyncpa %s2001, 1
    %2003 = vsyncpa [#allocation7], 1

</llo_original>
